<compile_context>
chip_gen: v7x
topology: tpu7x:2x2x1
jax: 0.10.0
libtpu: 0.0.40
codegen_flags: <defaults>
</compile_context>

<pallas_src>
import functools

import jax
import jax.numpy as jnp
import numpy as np
from jax.experimental import pallas as pl
from jax.experimental.pallas import tpu as pltpu


# ---------------------------------------------------------------------------
# Layout helpers
# ---------------------------------------------------------------------------
# Per sample/channel, activations are a flat length-L "slab":
#   [ start zero lanes | H real rows, each W+2*pad cols (pad cols = 0) | zeros ]
# `start` is 128-aligned and >= pad*Wp + pad so every conv tap is an
# in-bounds contiguous lane slice; L is rounded up to a multiple of 128.
# Invariant: every lane outside the real H x W pixels is exactly 0.

def _round_up(x, m):
    return ((x + m - 1) // m) * m


def _col_mask(nvalid, Wp, pad, W):
    col = jax.lax.broadcasted_iota(jnp.int32, (1, nvalid), 1) % Wp
    return (col >= pad) & (col < pad + W)


# ---------------------------------------------------------------------------
# Fully fused kernel (one sample per grid step; everything stays in VMEM)
# ---------------------------------------------------------------------------
def _rcnn_kernel(x_ref, w0_ref, b0_ref, wblk_ref, bblk_ref, wL_ref, bL_ref,
                 o_ref, slab_ref, tmp_ref, *, K, pad, H, W, start, n_blocks):
    Wp = W + 2 * pad
    nvalid = H * Wp
    rel = [(kh - pad) * Wp + (kw - pad) for kh in range(K) for kw in range(K)]
    mask = _col_mask(nvalid, Wp, pad, W)

    def conv_band(src_full, w, b):
        # src_full: (Cin, L) f32 slab, zero outside real pixels.
        taps = [src_full[:, start + r:start + r + nvalid] for r in rel]
        patches = jnp.concatenate(taps, axis=0)            # (K*K*Cin, nvalid)
        acc = jnp.dot(w.astype(jnp.float32), patches,
                      preferred_element_type=jnp.float32)  # (Cout, nvalid)
        acc = acc + b.astype(jnp.float32)                  # (Cout, 1) bcast
        return jnp.where(mask, acc, 0.0)                   # keep pad cols 0

    # Zero the scratch slabs (establishes the zero-margin invariant; the band
    # region is overwritten below).  Unconditional: with a "parallel" grid
    # each core must establish its own margins.
    slab_ref[...] = jnp.zeros_like(slab_ref)
    tmp_ref[...] = jnp.zeros_like(tmp_ref)

    # ---- stem: Conv2d(in->hid) + GroupNorm(groups=1, affine=False) + ReLU
    x = x_ref[0].astype(jnp.float32)                       # (Cin_pad, L)
    y = conv_band(x, w0_ref[...], b0_ref[...])             # (hid, nvalid)
    cnt = jnp.float32(y.shape[0] * H * W)
    mean = jnp.sum(y) / cnt                                # masked lanes are 0
    var = jnp.sum(jnp.where(mask, jnp.square(y - mean), 0.0)) / cnt
    inv = jax.lax.rsqrt(var + 1e-5)
    y = jnp.where(mask, jnp.maximum((y - mean) * inv, 0.0), 0.0)
    slab_ref[:, start:start + nvalid] = y

    # ---- residual blocks: relu(x + conv2(relu(conv1(x))))  (unrolled)
    for i in range(n_blocks):
        cur = slab_ref[...]                                # (hid, L)
        t = conv_band(cur, wblk_ref[2 * i], bblk_ref[2 * i])
        tmp_ref[:, start:start + nvalid] = jnp.maximum(t, 0.0)
        y2 = conv_band(tmp_ref[...], wblk_ref[2 * i + 1], bblk_ref[2 * i + 1])
        res = cur[:, start:start + nvalid]
        slab_ref[:, start:start + nvalid] = jnp.maximum(y2 + res, 0.0)

    # ---- head: Conv2d(hid->out), no activation
    yh = conv_band(slab_ref[...], wL_ref[...], bL_ref[...])
    o_ref[0] = yh.astype(o_ref.dtype)


# ---------------------------------------------------------------------------
# Host-side weight / activation layout prep
# ---------------------------------------------------------------------------
def _prep_w(w, cin_pad=None):
    """(K, K, Cin, Cout) -> (Cout, K*K*Cin_pad) matching the tap concat order."""
    K, _, Cin, Cout = w.shape
    wt = jnp.transpose(w, (3, 0, 1, 2))                    # (Cout, K, K, Cin)
    if cin_pad is not None and cin_pad > Cin:
        wt = jnp.pad(wt, ((0, 0), (0, 0), (0, 0), (0, cin_pad - Cin)))
    return wt.reshape(Cout, -1)


def _prep_b(b):
    return b.reshape(-1, 1)


def _to_flat(x_nchw, pad, start, L, cin_pad):
    """(N, C, H, W) -> (N, cin_pad, L) zero-invariant flattened padded slab."""
    N, C, H, W = x_nchw.shape
    Wp = W + 2 * pad
    xp = jnp.pad(x_nchw, ((0, 0), (0, cin_pad - C), (0, 0), (pad, pad)))
    band = xp.reshape(N, cin_pad, H * Wp)
    return jnp.pad(band, ((0, 0), (0, 0), (start, L - start - H * Wp)))


# ---------------------------------------------------------------------------
# rcnn model (parameters + forward)
# ---------------------------------------------------------------------------
def init_rcnn_params(key, in_c, out_c, hid_c, K, depth):
    """Deterministic synthetic weights (not a checkpoint load)."""
    def conv_init(k, cin, cout):
        kw, kb = jax.random.split(k)
        scale = 1.0 / np.sqrt(K * K * cin)
        w = jax.random.normal(kw, (K, K, cin, cout), jnp.float32) * scale
        b = jax.random.normal(kb, (cout,), jnp.float32) * scale
        return w, b

    n_blocks = depth - 2
    keys = jax.random.split(key, 2 + 2 * n_blocks)
    params = {}
    params["conv0_w"], params["conv0_b"] = conv_init(keys[0], in_c, hid_c)
    blocks = []
    for i in range(n_blocks):
        w1, b1 = conv_init(keys[1 + 2 * i], hid_c, hid_c)
        w2, b2 = conv_init(keys[2 + 2 * i], hid_c, hid_c)
        blocks.append({"w1": w1, "b1": b1, "w2": w2, "b2": b2})
    params["blocks"] = blocks
    params["convL_w"], params["convL_b"] = conv_init(keys[-1], hid_c, out_c)
    return params


@functools.partial(jax.jit, static_argnames=("padding",))
def rcnn_forward(params, x_nchw, *, padding):
    N, Cin, H, W = x_nchw.shape
    K = params["conv0_w"].shape[0]
    hid = params["conv0_w"].shape[3]
    out_c = params["convL_w"].shape[3]
    assert K == 2 * padding + 1, "this kernel implements 'same' convolutions"
    pad = padding
    Wp = W + 2 * pad
    nvalid = H * Wp
    # 128-lane-aligned band offset / slab length.
    start = max(128, _round_up(pad * Wp + pad, 128))
    L = _round_up(start + nvalid + pad * Wp + pad, 128)
    cin_pad = _round_up(max(Cin, 8), 8)            # full f32 sublane tiles

    xf = _to_flat(x_nchw, pad, start, L, cin_pad)  # (N, cin_pad, L)

    w0 = _prep_w(params["conv0_w"], cin_pad)       # (hid, K*K*cin_pad)
    b0 = _prep_b(params["conv0_b"])                # (hid, 1)
    n_blocks = len(params["blocks"])
    if n_blocks > 0:
        wblk = jnp.stack([w for bp in params["blocks"]
                          for w in (_prep_w(bp["w1"]), _prep_w(bp["w2"]))])
        bblk = jnp.stack([b for bp in params["blocks"]
                          for b in (_prep_b(bp["b1"]), _prep_b(bp["b2"]))])
    else:  # dummy operands; the in-kernel loop never reads them
        wblk = jnp.zeros((1, hid, K * K * hid), jnp.float32)
        bblk = jnp.zeros((1, hid, 1), jnp.float32)
    wL = _prep_w(params["convL_w"])                # (out_c, K*K*hid)
    bL = _prep_b(params["convL_b"])                # (out_c, 1)

    kernel = functools.partial(_rcnn_kernel, K=K, pad=pad, H=H, W=W,
                               start=start, n_blocks=n_blocks)
    band_out = pl.pallas_call(
        kernel,
        out_shape=jax.ShapeDtypeStruct((N, out_c, nvalid), x_nchw.dtype),
        grid=(N,),
        in_specs=[
            pl.BlockSpec((1, cin_pad, L), lambda n: (n, 0, 0)),
            pl.BlockSpec(w0.shape, lambda n: (0, 0)),
            pl.BlockSpec(b0.shape, lambda n: (0, 0)),
            pl.BlockSpec(wblk.shape, lambda n: (0, 0, 0)),
            pl.BlockSpec(bblk.shape, lambda n: (0, 0, 0)),
            pl.BlockSpec(wL.shape, lambda n: (0, 0)),
            pl.BlockSpec(bL.shape, lambda n: (0, 0)),
        ],
        out_specs=pl.BlockSpec((1, out_c, nvalid), lambda n: (n, 0, 0)),
        scratch_shapes=[pltpu.VMEM((hid, L), jnp.float32),
                        pltpu.VMEM((hid, L), jnp.float32)],
        compiler_params=pltpu.CompilerParams(
            dimension_semantics=("parallel",)),
    )(xf, w0, b0, wblk, bblk, wL, bL)

    # (N, out_c, H*Wp) band -> (N, out_c, H, W)
    return band_out.reshape(N, out_c, H, Wp)[:, :, :, pad:pad + W]


# ---------------------------------------------------------------------------
# Pure-JAX reference for validation
# ---------------------------------------------------------------------------
def _conv_ref(x, w, b, padding):
    y = jax.lax.conv_general_dilated(
        x, w, window_strides=(1, 1),
        padding=[(padding, padding), (padding, padding)],
        dimension_numbers=("NHWC", "HWIO", "NHWC"))
    return y + b.reshape(1, 1, 1, -1)


def rcnn_forward_ref(params, x_nchw, *, padding):
    x = jnp.transpose(x_nchw, (0, 2, 3, 1))
    h = _conv_ref(x, params["conv0_w"], params["conv0_b"], padding)
    mean = jnp.mean(h, axis=(1, 2, 3), keepdims=True)
    var = jnp.mean(jnp.square(h - mean), axis=(1, 2, 3), keepdims=True)
    h = jax.nn.relu((h - mean) * jax.lax.rsqrt(var + 1e-5))
    for bp in params["blocks"]:
        t = jax.nn.relu(_conv_ref(h, bp["w1"], bp["b1"], padding))
        h = jax.nn.relu(h + _conv_ref(t, bp["w2"], bp["b2"], padding))
    y = _conv_ref(h, params["convL_w"], params["convL_b"], padding)
    return jnp.transpose(y, (0, 3, 1, 2))


# ---------------------------------------------------------------------------
if __name__ == "__main__":
    # Small config consistent with the module's constructor.
    in_channel, out_channel, hid_channel = 4, 4, 8
    kernel_size, padding, depth = 3, 1, 4
    N, H, W = 2, 16, 16

    key = jax.random.PRNGKey(0)
    kp, kx = jax.random.split(key)
    params = init_rcnn_params(kp, in_channel, out_channel, hid_channel,
                              kernel_size, depth)
    x = jax.random.normal(kx, (N, in_channel, H, W), jnp.float32)

    out = jax.block_until_ready(rcnn_forward(params, x, padding=padding))
    ref = jax.block_until_ready(rcnn_forward_ref(params, x, padding=padding))

    assert out.shape == (N, out_channel, H, W), out.shape
    np.testing.assert_allclose(np.asarray(out), np.asarray(ref),
                               rtol=1e-4, atol=1e-4)
    print("KERNEL_OK")
</pallas_src>

<mosaic_0001>
module attributes {stable_mosaic.version = 11 : i64} {
  func.func @_rcnn_kernel(%arg0: i32, %arg1: memref<1x8x512xf32, #tpu.memory_space<vmem>>, %arg2: memref<8x72xf32, #tpu.memory_space<vmem>>, %arg3: memref<8x1xf32, #tpu.memory_space<vmem>>, %arg4: memref<4x8x72xf32, #tpu.memory_space<vmem>>, %arg5: memref<4x8x1xf32, #tpu.memory_space<vmem>>, %arg6: memref<4x72xf32, #tpu.memory_space<vmem>>, %arg7: memref<4x1xf32, #tpu.memory_space<vmem>>, %arg8: memref<1x4x288xf32, #tpu.memory_space<vmem>>, %arg9: memref<8x512xf32, #tpu.memory_space<vmem>>, %arg10: memref<8x512xf32, #tpu.memory_space<vmem>>) attributes {dimension_semantics = [#tpu.dimension_semantics<parallel>], iteration_bounds = array<i64: 2>, scalar_prefetch = 0 : i64, scratch_operands = 2 : i64, tpu.core_type = #tpu.core_type<tc>, window_params = [{transform_indices = @transform_0, window_bounds = array<i64: 1, 8, 512>}, {pipeline_mode = #tpu.pipeline_mode<synchronous>, transform_indices = @transform_1, window_bounds = array<i64: 8, 72>}, {pipeline_mode = #tpu.pipeline_mode<synchronous>, transform_indices = @transform_2, window_bounds = array<i64: 8, 1>}, {pipeline_mode = #tpu.pipeline_mode<synchronous>, transform_indices = @transform_3, window_bounds = array<i64: 4, 8, 72>}, {pipeline_mode = #tpu.pipeline_mode<synchronous>, transform_indices = @transform_4, window_bounds = array<i64: 4, 8, 1>}, {pipeline_mode = #tpu.pipeline_mode<synchronous>, transform_indices = @transform_5, window_bounds = array<i64: 4, 72>}, {pipeline_mode = #tpu.pipeline_mode<synchronous>, transform_indices = @transform_6, window_bounds = array<i64: 4, 1>}, {transform_indices = @transform_7, window_bounds = array<i64: 1, 4, 288>}]} {
    %0 = tpu.iota {dimensions = array<i32: 1>} : vector<1x288xi32>
    %c18_i32 = arith.constant 18 : i32
    %c0_i32 = arith.constant 0 : i32
    %1 = arith.cmpi eq, %c18_i32, %c0_i32 : i32
    %c1_i32 = arith.constant 1 : i32
    %2 = arith.select %1, %c1_i32, %c18_i32 : i32
    %3 = vector.broadcast %2 : i32 to vector<1x288xi32>
    %4 = arith.remsi %0, %3 : vector<1x288xi32>
    %c0_i32_0 = arith.constant 0 : i32
    %5 = vector.broadcast %c0_i32_0 : i32 to vector<1x288xi32>
    %6 = arith.cmpi ne, %4, %5 : vector<1x288xi32>
    %c0_i32_1 = arith.constant 0 : i32
    %7 = vector.broadcast %c0_i32_1 : i32 to vector<1x288xi32>
    %8 = arith.cmpi slt, %4, %7 : vector<1x288xi32>
    %c0_i32_2 = arith.constant 0 : i32
    %9 = arith.cmpi slt, %2, %c0_i32_2 : i32
    %10 = vector.broadcast %9 : i1 to vector<1x288xi1>
    %11 = vector.broadcast %10 : vector<1x288xi1> to vector<1x288xi1>
    %12 = arith.xori %8, %11 : vector<1x288xi1>
    %13 = arith.andi %12, %6 : vector<1x288xi1>
    %14 = vector.broadcast %2 : i32 to vector<1x288xi32>
    %15 = arith.addi %4, %14 : vector<1x288xi32>
    %16 = arith.select %13, %15, %4 : vector<1x288xi1>, vector<1x288xi32>
    %c1_i32_3 = arith.constant 1 : i32
    %17 = vector.broadcast %c1_i32_3 : i32 to vector<1x288xi32>
    %18 = arith.cmpi sge, %16, %17 : vector<1x288xi32>
    %c17_i32 = arith.constant 17 : i32
    %19 = vector.broadcast %c17_i32 : i32 to vector<1x288xi32>
    %20 = arith.cmpi slt, %16, %19 : vector<1x288xi32>
    %21 = arith.andi %18, %20 : vector<1x288xi1>
    %cst = arith.constant 0.000000e+00 : f32
    %22 = vector.broadcast %cst : f32 to vector<8x512xf32>
    %c0 = arith.constant 0 : index
    %c0_4 = arith.constant 0 : index
    %23 = vector.load %arg9[%c0, %c0_4] : memref<8x512xf32, #tpu.memory_space<vmem>>, vector<8x512xf32>
    tpu.vector_store %arg9[%c0, %c0_4], %22 {strides = array<i32>} : memref<8x512xf32, #tpu.memory_space<vmem>>, vector<8x512xf32>,
    %cst_5 = arith.constant 0.000000e+00 : f32
    %24 = vector.broadcast %cst_5 : f32 to vector<8x512xf32>
    %c0_6 = arith.constant 0 : index
    %c0_7 = arith.constant 0 : index
    %25 = vector.load %arg10[%c0_6, %c0_7] : memref<8x512xf32, #tpu.memory_space<vmem>>, vector<8x512xf32>
    tpu.vector_store %arg10[%c0_6, %c0_7], %24 {strides = array<i32>} : memref<8x512xf32, #tpu.memory_space<vmem>>, vector<8x512xf32>,
    %c0_8 = arith.constant 0 : index
    %c0_9 = arith.constant 0 : index
    %c0_10 = arith.constant 0 : index
    %26 = vector.load %arg1[%c0_8, %c0_9, %c0_10] : memref<1x8x512xf32, #tpu.memory_space<vmem>>, vector<1x8x512xf32>
    %27 = vector.shape_cast %26 : vector<1x8x512xf32> to vector<8x512xf32>
    %c0_11 = arith.constant 0 : index
    %c0_12 = arith.constant 0 : index
    %28 = vector.load %arg2[%c0_11, %c0_12] : memref<8x72xf32, #tpu.memory_space<vmem>>, vector<8x72xf32>
    %c0_13 = arith.constant 0 : index
    %c0_14 = arith.constant 0 : index
    %29 = vector.load %arg3[%c0_13, %c0_14] : memref<8x1xf32, #tpu.memory_space<vmem>>, vector<8x1xf32>
    %30 = vector.extract_strided_slice %27 {offsets = [0, 109], sizes = [8, 288], strides = [1, 1]} : vector<8x512xf32> to vector<8x288xf32>
    %31 = vector.extract_strided_slice %27 {offsets = [0, 110], sizes = [8, 288], strides = [1, 1]} : vector<8x512xf32> to vector<8x288xf32>
    %32 = vector.extract_strided_slice %27 {offsets = [0, 111], sizes = [8, 288], strides = [1, 1]} : vector<8x512xf32> to vector<8x288xf32>
    %33 = vector.extract_strided_slice %27 {offsets = [0, 127], sizes = [8, 288], strides = [1, 1]} : vector<8x512xf32> to vector<8x288xf32>
    %34 = vector.extract_strided_slice %27 {offsets = [0, 128], sizes = [8, 288], strides = [1, 1]} : vector<8x512xf32> to vector<8x288xf32>
    %35 = vector.extract_strided_slice %27 {offsets = [0, 129], sizes = [8, 288], strides = [1, 1]} : vector<8x512xf32> to vector<8x288xf32>
    %36 = vector.extract_strided_slice %27 {offsets = [0, 145], sizes = [8, 288], strides = [1, 1]} : vector<8x512xf32> to vector<8x288xf32>
    %37 = vector.extract_strided_slice %27 {offsets = [0, 146], sizes = [8, 288], strides = [1, 1]} : vector<8x512xf32> to vector<8x288xf32>
    %38 = vector.extract_strided_slice %27 {offsets = [0, 147], sizes = [8, 288], strides = [1, 1]} : vector<8x512xf32> to vector<8x288xf32>
    %39 = tpu.concatenate %30, %31, %32, %33, %34, %35, %36, %37, %38 in 0 : vector<8x288xf32>, vector<8x288xf32>, vector<8x288xf32>, vector<8x288xf32>, vector<8x288xf32>, vector<8x288xf32>, vector<8x288xf32>, vector<8x288xf32>, vector<8x288xf32> -> vector<72x288xf32>
    %cst_15 = arith.constant dense<0.000000e+00> : vector<8x288xf32>
    %40 = tpu.matmul %28, %39, %cst_15 {dimension_numbers = #tpu.dot_dimension_numbers<[1], [0], [0], [1], [0, 0, 1, 1], [], []>} : vector<8x72xf32>, vector<72x288xf32>, vector<8x288xf32> -> vector<8x288xf32>
    %41 = vector.broadcast %29 : vector<8x1xf32> to vector<8x288xf32>
    %42 = arith.addf %40, %41 : vector<8x288xf32>
    %cst_16 = arith.constant 0.000000e+00 : f32
    %43 = vector.shape_cast %21 : vector<1x288xi1> to vector<1x288xi1>
    %44 = vector.broadcast %43 : vector<1x288xi1> to vector<8x288xi1>
    %45 = vector.broadcast %cst_16 : f32 to vector<8x288xf32>
    %46 = arith.select %44, %42, %45 : vector<8x288xi1>, vector<8x288xf32>
    %47 = vector.shape_cast %46 : vector<8x288xf32> to vector<1x8x288xf32>
    %cst_17 = arith.constant dense<0.000000e+00> : vector<1xf32>
    %48 = vector.multi_reduction <add>, %47, %cst_17 [1, 2] : vector<1x8x288xf32> to vector<1xf32>
    %49 = vector.shape_cast %48 : vector<1xf32> to vector<1x1x1xf32>
    %50 = vector.extract %49[0, 0, 0] : f32 from vector<1x1x1xf32>
    %cst_18 = arith.constant 2.048000e+03 : f32
    %51 = arith.divf %50, %cst_18 : f32
    %52 = vector.broadcast %51 : f32 to vector<8x288xf32>
    %53 = arith.subf %46, %52 : vector<8x288xf32>
    %54 = arith.mulf %53, %53 : vector<8x288xf32>
    %cst_19 = arith.constant 0.000000e+00 : f32
    %55 = vector.shape_cast %21 : vector<1x288xi1> to vector<1x288xi1>
    %56 = vector.broadcast %55 : vector<1x288xi1> to vector<8x288xi1>
    %57 = vector.broadcast %cst_19 : f32 to vector<8x288xf32>
    %58 = arith.select %56, %54, %57 : vector<8x288xi1>, vector<8x288xf32>
    %59 = vector.shape_cast %58 : vector<8x288xf32> to vector<1x8x288xf32>
    %cst_20 = arith.constant dense<0.000000e+00> : vector<1xf32>
    %60 = vector.multi_reduction <add>, %59, %cst_20 [1, 2] : vector<1x8x288xf32> to vector<1xf32>
    %61 = vector.shape_cast %60 : vector<1xf32> to vector<1x1x1xf32>
    %62 = vector.extract %61[0, 0, 0] : f32 from vector<1x1x1xf32>
    %cst_21 = arith.constant 2.048000e+03 : f32
    %63 = arith.divf %62, %cst_21 : f32
    %cst_22 = arith.constant 9.99999974E-6 : f32
    %64 = arith.addf %63, %cst_22 : f32
    %65 = math.rsqrt %64 : f32
    %66 = vector.broadcast %51 : f32 to vector<8x288xf32>
    %67 = arith.subf %46, %66 : vector<8x288xf32>
    %68 = vector.broadcast %65 : f32 to vector<8x288xf32>
    %69 = arith.mulf %67, %68 : vector<8x288xf32>
    %cst_23 = arith.constant 0.000000e+00 : f32
    %70 = vector.broadcast %cst_23 : f32 to vector<8x288xf32>
    %71 = arith.maximumf %69, %70 : vector<8x288xf32>
    %cst_24 = arith.constant 0.000000e+00 : f32
    %72 = vector.shape_cast %21 : vector<1x288xi1> to vector<1x288xi1>
    %73 = vector.broadcast %72 : vector<1x288xi1> to vector<8x288xi1>
    %74 = vector.broadcast %cst_24 : f32 to vector<8x288xf32>
    %75 = arith.select %73, %71, %74 : vector<8x288xi1>, vector<8x288xf32>
    %c0_25 = arith.constant 0 : index
    %c128 = arith.constant 128 : index
    %76 = vector.load %arg9[%c0_25, %c128] : memref<8x512xf32, #tpu.memory_space<vmem>>, vector<8x288xf32>
    tpu.vector_store %arg9[%c0_25, %c128], %75 {strides = array<i32>} : memref<8x512xf32, #tpu.memory_space<vmem>>, vector<8x288xf32>,
    %c0_26 = arith.constant 0 : index
    %c0_27 = arith.constant 0 : index
    %77 = vector.load %arg9[%c0_26, %c0_27] : memref<8x512xf32, #tpu.memory_space<vmem>>, vector<8x512xf32>
    %c0_28 = arith.constant 0 : index
    %c0_29 = arith.constant 0 : index
    %c0_30 = arith.constant 0 : index
    %78 = vector.load %arg4[%c0_28, %c0_29, %c0_30] : memref<4x8x72xf32, #tpu.memory_space<vmem>>, vector<1x8x72xf32>
    %79 = vector.shape_cast %78 : vector<1x8x72xf32> to vector<8x72xf32>
    %c0_31 = arith.constant 0 : index
    %c0_32 = arith.constant 0 : index
    %c0_33 = arith.constant 0 : index
    %80 = vector.load %arg5[%c0_31, %c0_32, %c0_33] : memref<4x8x1xf32, #tpu.memory_space<vmem>>, vector<1x8x1xf32>
    %81 = vector.shape_cast %80 : vector<1x8x1xf32> to vector<8x1xf32>
    %82 = vector.extract_strided_slice %77 {offsets = [0, 109], sizes = [8, 288], strides = [1, 1]} : vector<8x512xf32> to vector<8x288xf32>
    %83 = vector.extract_strided_slice %77 {offsets = [0, 110], sizes = [8, 288], strides = [1, 1]} : vector<8x512xf32> to vector<8x288xf32>
    %84 = vector.extract_strided_slice %77 {offsets = [0, 111], sizes = [8, 288], strides = [1, 1]} : vector<8x512xf32> to vector<8x288xf32>
    %85 = vector.extract_strided_slice %77 {offsets = [0, 127], sizes = [8, 288], strides = [1, 1]} : vector<8x512xf32> to vector<8x288xf32>
    %86 = vector.extract_strided_slice %77 {offsets = [0, 128], sizes = [8, 288], strides = [1, 1]} : vector<8x512xf32> to vector<8x288xf32>
    %87 = vector.extract_strided_slice %77 {offsets = [0, 129], sizes = [8, 288], strides = [1, 1]} : vector<8x512xf32> to vector<8x288xf32>
    %88 = vector.extract_strided_slice %77 {offsets = [0, 145], sizes = [8, 288], strides = [1, 1]} : vector<8x512xf32> to vector<8x288xf32>
    %89 = vector.extract_strided_slice %77 {offsets = [0, 146], sizes = [8, 288], strides = [1, 1]} : vector<8x512xf32> to vector<8x288xf32>
    %90 = vector.extract_strided_slice %77 {offsets = [0, 147], sizes = [8, 288], strides = [1, 1]} : vector<8x512xf32> to vector<8x288xf32>
    %91 = tpu.concatenate %82, %83, %84, %85, %86, %87, %88, %89, %90 in 0 : vector<8x288xf32>, vector<8x288xf32>, vector<8x288xf32>, vector<8x288xf32>, vector<8x288xf32>, vector<8x288xf32>, vector<8x288xf32>, vector<8x288xf32>, vector<8x288xf32> -> vector<72x288xf32>
    %cst_34 = arith.constant dense<0.000000e+00> : vector<8x288xf32>
    %92 = tpu.matmul %79, %91, %cst_34 {dimension_numbers = #tpu.dot_dimension_numbers<[1], [0], [0], [1], [0, 0, 1, 1], [], []>} : vector<8x72xf32>, vector<72x288xf32>, vector<8x288xf32> -> vector<8x288xf32>
    %93 = vector.broadcast %81 : vector<8x1xf32> to vector<8x288xf32>
    %94 = arith.addf %92, %93 : vector<8x288xf32>
    %cst_35 = arith.constant 0.000000e+00 : f32
    %95 = vector.shape_cast %21 : vector<1x288xi1> to vector<1x288xi1>
    %96 = vector.broadcast %95 : vector<1x288xi1> to vector<8x288xi1>
    %97 = vector.broadcast %cst_35 : f32 to vector<8x288xf32>
    %98 = arith.select %96, %94, %97 : vector<8x288xi1>, vector<8x288xf32>
    %cst_36 = arith.constant 0.000000e+00 : f32
    %99 = vector.broadcast %cst_36 : f32 to vector<8x288xf32>
    %100 = arith.maximumf %98, %99 : vector<8x288xf32>
    %c0_37 = arith.constant 0 : index
    %c128_38 = arith.constant 128 : index
    %101 = vector.load %arg10[%c0_37, %c128_38] : memref<8x512xf32, #tpu.memory_space<vmem>>, vector<8x288xf32>
    tpu.vector_store %arg10[%c0_37, %c128_38], %100 {strides = array<i32>} : memref<8x512xf32, #tpu.memory_space<vmem>>, vector<8x288xf32>,
    %c0_39 = arith.constant 0 : index
    %c0_40 = arith.constant 0 : index
    %102 = vector.load %arg10[%c0_39, %c0_40] : memref<8x512xf32, #tpu.memory_space<vmem>>, vector<8x512xf32>
    %c1 = arith.constant 1 : index
    %c0_41 = arith.constant 0 : index
    %c0_42 = arith.constant 0 : index
    %103 = vector.load %arg4[%c1, %c0_41, %c0_42] : memref<4x8x72xf32, #tpu.memory_space<vmem>>, vector<1x8x72xf32>
    %104 = vector.shape_cast %103 : vector<1x8x72xf32> to vector<8x72xf32>
    %c1_43 = arith.constant 1 : index
    %c0_44 = arith.constant 0 : index
    %c0_45 = arith.constant 0 : index
    %105 = vector.load %arg5[%c1_43, %c0_44, %c0_45] : memref<4x8x1xf32, #tpu.memory_space<vmem>>, vector<1x8x1xf32>
    %106 = vector.shape_cast %105 : vector<1x8x1xf32> to vector<8x1xf32>
    %107 = vector.extract_strided_slice %102 {offsets = [0, 109], sizes = [8, 288], strides = [1, 1]} : vector<8x512xf32> to vector<8x288xf32>
    %108 = vector.extract_strided_slice %102 {offsets = [0, 110], sizes = [8, 288], strides = [1, 1]} : vector<8x512xf32> to vector<8x288xf32>
    %109 = vector.extract_strided_slice %102 {offsets = [0, 111], sizes = [8, 288], strides = [1, 1]} : vector<8x512xf32> to vector<8x288xf32>
    %110 = vector.extract_strided_slice %102 {offsets = [0, 127], sizes = [8, 288], strides = [1, 1]} : vector<8x512xf32> to vector<8x288xf32>
    %111 = vector.extract_strided_slice %102 {offsets = [0, 128], sizes = [8, 288], strides = [1, 1]} : vector<8x512xf32> to vector<8x288xf32>
    %112 = vector.extract_strided_slice %102 {offsets = [0, 129], sizes = [8, 288], strides = [1, 1]} : vector<8x512xf32> to vector<8x288xf32>
    %113 = vector.extract_strided_slice %102 {offsets = [0, 145], sizes = [8, 288], strides = [1, 1]} : vector<8x512xf32> to vector<8x288xf32>
    %114 = vector.extract_strided_slice %102 {offsets = [0, 146], sizes = [8, 288], strides = [1, 1]} : vector<8x512xf32> to vector<8x288xf32>
    %115 = vector.extract_strided_slice %102 {offsets = [0, 147], sizes = [8, 288], strides = [1, 1]} : vector<8x512xf32> to vector<8x288xf32>
    %116 = tpu.concatenate %107, %108, %109, %110, %111, %112, %113, %114, %115 in 0 : vector<8x288xf32>, vector<8x288xf32>, vector<8x288xf32>, vector<8x288xf32>, vector<8x288xf32>, vector<8x288xf32>, vector<8x288xf32>, vector<8x288xf32>, vector<8x288xf32> -> vector<72x288xf32>
    %cst_46 = arith.constant dense<0.000000e+00> : vector<8x288xf32>
    %117 = tpu.matmul %104, %116, %cst_46 {dimension_numbers = #tpu.dot_dimension_numbers<[1], [0], [0], [1], [0, 0, 1, 1], [], []>} : vector<8x72xf32>, vector<72x288xf32>, vector<8x288xf32> -> vector<8x288xf32>
    %118 = vector.broadcast %106 : vector<8x1xf32> to vector<8x288xf32>
    %119 = arith.addf %117, %118 : vector<8x288xf32>
    %cst_47 = arith.constant 0.000000e+00 : f32
    %120 = vector.shape_cast %21 : vector<1x288xi1> to vector<1x288xi1>
    %121 = vector.broadcast %120 : vector<1x288xi1> to vector<8x288xi1>
    %122 = vector.broadcast %cst_47 : f32 to vector<8x288xf32>
    %123 = arith.select %121, %119, %122 : vector<8x288xi1>, vector<8x288xf32>
    %124 = vector.extract_strided_slice %77 {offsets = [0, 128], sizes = [8, 288], strides = [1, 1]} : vector<8x512xf32> to vector<8x288xf32>
    %125 = arith.addf %123, %124 : vector<8x288xf32>
    %cst_48 = arith.constant 0.000000e+00 : f32
    %126 = vector.broadcast %cst_48 : f32 to vector<8x288xf32>
    %127 = arith.maximumf %125, %126 : vector<8x288xf32>
    %c0_49 = arith.constant 0 : index
    %c128_50 = arith.constant 128 : index
    %128 = vector.load %arg9[%c0_49, %c128_50] : memref<8x512xf32, #tpu.memory_space<vmem>>, vector<8x288xf32>
    tpu.vector_store %arg9[%c0_49, %c128_50], %127 {strides = array<i32>} : memref<8x512xf32, #tpu.memory_space<vmem>>, vector<8x288xf32>,
    %c0_51 = arith.constant 0 : index
    %c0_52 = arith.constant 0 : index
    %129 = vector.load %arg9[%c0_51, %c0_52] : memref<8x512xf32, #tpu.memory_space<vmem>>, vector<8x512xf32>
    %c2 = arith.constant 2 : index
    %c0_53 = arith.constant 0 : index
    %c0_54 = arith.constant 0 : index
    %130 = vector.load %arg4[%c2, %c0_53, %c0_54] : memref<4x8x72xf32, #tpu.memory_space<vmem>>, vector<1x8x72xf32>
    %131 = vector.shape_cast %130 : vector<1x8x72xf32> to vector<8x72xf32>
    %c2_55 = arith.constant 2 : index
    %c0_56 = arith.constant 0 : index
    %c0_57 = arith.constant 0 : index
    %132 = vector.load %arg5[%c2_55, %c0_56, %c0_57] : memref<4x8x1xf32, #tpu.memory_space<vmem>>, vector<1x8x1xf32>
    %133 = vector.shape_cast %132 : vector<1x8x1xf32> to vector<8x1xf32>
    %134 = vector.extract_strided_slice %129 {offsets = [0, 109], sizes = [8, 288], strides = [1, 1]} : vector<8x512xf32> to vector<8x288xf32>
    %135 = vector.extract_strided_slice %129 {offsets = [0, 110], sizes = [8, 288], strides = [1, 1]} : vector<8x512xf32> to vector<8x288xf32>
    %136 = vector.extract_strided_slice %129 {offsets = [0, 111], sizes = [8, 288], strides = [1, 1]} : vector<8x512xf32> to vector<8x288xf32>
    %137 = vector.extract_strided_slice %129 {offsets = [0, 127], sizes = [8, 288], strides = [1, 1]} : vector<8x512xf32> to vector<8x288xf32>
    %138 = vector.extract_strided_slice %129 {offsets = [0, 128], sizes = [8, 288], strides = [1, 1]} : vector<8x512xf32> to vector<8x288xf32>
    %139 = vector.extract_strided_slice %129 {offsets = [0, 129], sizes = [8, 288], strides = [1, 1]} : vector<8x512xf32> to vector<8x288xf32>
    %140 = vector.extract_strided_slice %129 {offsets = [0, 145], sizes = [8, 288], strides = [1, 1]} : vector<8x512xf32> to vector<8x288xf32>
    %141 = vector.extract_strided_slice %129 {offsets = [0, 146], sizes = [8, 288], strides = [1, 1]} : vector<8x512xf32> to vector<8x288xf32>
    %142 = vector.extract_strided_slice %129 {offsets = [0, 147], sizes = [8, 288], strides = [1, 1]} : vector<8x512xf32> to vector<8x288xf32>
    %143 = tpu.concatenate %134, %135, %136, %137, %138, %139, %140, %141, %142 in 0 : vector<8x288xf32>, vector<8x288xf32>, vector<8x288xf32>, vector<8x288xf32>, vector<8x288xf32>, vector<8x288xf32>, vector<8x288xf32>, vector<8x288xf32>, vector<8x288xf32> -> vector<72x288xf32>
    %cst_58 = arith.constant dense<0.000000e+00> : vector<8x288xf32>
    %144 = tpu.matmul %131, %143, %cst_58 {dimension_numbers = #tpu.dot_dimension_numbers<[1], [0], [0], [1], [0, 0, 1, 1], [], []>} : vector<8x72xf32>, vector<72x288xf32>, vector<8x288xf32> -> vector<8x288xf32>
    %145 = vector.broadcast %133 : vector<8x1xf32> to vector<8x288xf32>
    %146 = arith.addf %144, %145 : vector<8x288xf32>
    %cst_59 = arith.constant 0.000000e+00 : f32
    %147 = vector.shape_cast %21 : vector<1x288xi1> to vector<1x288xi1>
    %148 = vector.broadcast %147 : vector<1x288xi1> to vector<8x288xi1>
    %149 = vector.broadcast %cst_59 : f32 to vector<8x288xf32>
    %150 = arith.select %148, %146, %149 : vector<8x288xi1>, vector<8x288xf32>
    %cst_60 = arith.constant 0.000000e+00 : f32
    %151 = vector.broadcast %cst_60 : f32 to vector<8x288xf32>
    %152 = arith.maximumf %150, %151 : vector<8x288xf32>
    %c0_61 = arith.constant 0 : index
    %c128_62 = arith.constant 128 : index
    %153 = vector.load %arg10[%c0_61, %c128_62] : memref<8x512xf32, #tpu.memory_space<vmem>>, vector<8x288xf32>
    tpu.vector_store %arg10[%c0_61, %c128_62], %152 {strides = array<i32>} : memref<8x512xf32, #tpu.memory_space<vmem>>, vector<8x288xf32>,
    %c0_63 = arith.constant 0 : index
    %c0_64 = arith.constant 0 : index
    %154 = vector.load %arg10[%c0_63, %c0_64] : memref<8x512xf32, #tpu.memory_space<vmem>>, vector<8x512xf32>
    %c3 = arith.constant 3 : index
    %c0_65 = arith.constant 0 : index
    %c0_66 = arith.constant 0 : index
    %155 = vector.load %arg4[%c3, %c0_65, %c0_66] : memref<4x8x72xf32, #tpu.memory_space<vmem>>, vector<1x8x72xf32>
    %156 = vector.shape_cast %155 : vector<1x8x72xf32> to vector<8x72xf32>
    %c3_67 = arith.constant 3 : index
    %c0_68 = arith.constant 0 : index
    %c0_69 = arith.constant 0 : index
    %157 = vector.load %arg5[%c3_67, %c0_68, %c0_69] : memref<4x8x1xf32, #tpu.memory_space<vmem>>, vector<1x8x1xf32>
    %158 = vector.shape_cast %157 : vector<1x8x1xf32> to vector<8x1xf32>
    %159 = vector.extract_strided_slice %154 {offsets = [0, 109], sizes = [8, 288], strides = [1, 1]} : vector<8x512xf32> to vector<8x288xf32>
    %160 = vector.extract_strided_slice %154 {offsets = [0, 110], sizes = [8, 288], strides = [1, 1]} : vector<8x512xf32> to vector<8x288xf32>
    %161 = vector.extract_strided_slice %154 {offsets = [0, 111], sizes = [8, 288], strides = [1, 1]} : vector<8x512xf32> to vector<8x288xf32>
    %162 = vector.extract_strided_slice %154 {offsets = [0, 127], sizes = [8, 288], strides = [1, 1]} : vector<8x512xf32> to vector<8x288xf32>
    %163 = vector.extract_strided_slice %154 {offsets = [0, 128], sizes = [8, 288], strides = [1, 1]} : vector<8x512xf32> to vector<8x288xf32>
    %164 = vector.extract_strided_slice %154 {offsets = [0, 129], sizes = [8, 288], strides = [1, 1]} : vector<8x512xf32> to vector<8x288xf32>
    %165 = vector.extract_strided_slice %154 {offsets = [0, 145], sizes = [8, 288], strides = [1, 1]} : vector<8x512xf32> to vector<8x288xf32>
    %166 = vector.extract_strided_slice %154 {offsets = [0, 146], sizes = [8, 288], strides = [1, 1]} : vector<8x512xf32> to vector<8x288xf32>
    %167 = vector.extract_strided_slice %154 {offsets = [0, 147], sizes = [8, 288], strides = [1, 1]} : vector<8x512xf32> to vector<8x288xf32>
    %168 = tpu.concatenate %159, %160, %161, %162, %163, %164, %165, %166, %167 in 0 : vector<8x288xf32>, vector<8x288xf32>, vector<8x288xf32>, vector<8x288xf32>, vector<8x288xf32>, vector<8x288xf32>, vector<8x288xf32>, vector<8x288xf32>, vector<8x288xf32> -> vector<72x288xf32>
    %cst_70 = arith.constant dense<0.000000e+00> : vector<8x288xf32>
    %169 = tpu.matmul %156, %168, %cst_70 {dimension_numbers = #tpu.dot_dimension_numbers<[1], [0], [0], [1], [0, 0, 1, 1], [], []>} : vector<8x72xf32>, vector<72x288xf32>, vector<8x288xf32> -> vector<8x288xf32>
    %170 = vector.broadcast %158 : vector<8x1xf32> to vector<8x288xf32>
    %171 = arith.addf %169, %170 : vector<8x288xf32>
    %cst_71 = arith.constant 0.000000e+00 : f32
    %172 = vector.shape_cast %21 : vector<1x288xi1> to vector<1x288xi1>
    %173 = vector.broadcast %172 : vector<1x288xi1> to vector<8x288xi1>
    %174 = vector.broadcast %cst_71 : f32 to vector<8x288xf32>
    %175 = arith.select %173, %171, %174 : vector<8x288xi1>, vector<8x288xf32>
    %176 = vector.extract_strided_slice %129 {offsets = [0, 128], sizes = [8, 288], strides = [1, 1]} : vector<8x512xf32> to vector<8x288xf32>
    %177 = arith.addf %175, %176 : vector<8x288xf32>
    %cst_72 = arith.constant 0.000000e+00 : f32
    %178 = vector.broadcast %cst_72 : f32 to vector<8x288xf32>
    %179 = arith.maximumf %177, %178 : vector<8x288xf32>
    %c0_73 = arith.constant 0 : index
    %c128_74 = arith.constant 128 : index
    %180 = vector.load %arg9[%c0_73, %c128_74] : memref<8x512xf32, #tpu.memory_space<vmem>>, vector<8x288xf32>
    tpu.vector_store %arg9[%c0_73, %c128_74], %179 {strides = array<i32>} : memref<8x512xf32, #tpu.memory_space<vmem>>, vector<8x288xf32>,
    %c0_75 = arith.constant 0 : index
    %c0_76 = arith.constant 0 : index
    %181 = vector.load %arg9[%c0_75, %c0_76] : memref<8x512xf32, #tpu.memory_space<vmem>>, vector<8x512xf32>
    %c0_77 = arith.constant 0 : index
    %c0_78 = arith.constant 0 : index
    %182 = vector.load %arg6[%c0_77, %c0_78] : memref<4x72xf32, #tpu.memory_space<vmem>>, vector<4x72xf32>
    %c0_79 = arith.constant 0 : index
    %c0_80 = arith.constant 0 : index
    %183 = vector.load %arg7[%c0_79, %c0_80] : memref<4x1xf32, #tpu.memory_space<vmem>>, vector<4x1xf32>
    %184 = vector.extract_strided_slice %181 {offsets = [0, 109], sizes = [8, 288], strides = [1, 1]} : vector<8x512xf32> to vector<8x288xf32>
    %185 = vector.extract_strided_slice %181 {offsets = [0, 110], sizes = [8, 288], strides = [1, 1]} : vector<8x512xf32> to vector<8x288xf32>
    %186 = vector.extract_strided_slice %181 {offsets = [0, 111], sizes = [8, 288], strides = [1, 1]} : vector<8x512xf32> to vector<8x288xf32>
    %187 = vector.extract_strided_slice %181 {offsets = [0, 127], sizes = [8, 288], strides = [1, 1]} : vector<8x512xf32> to vector<8x288xf32>
    %188 = vector.extract_strided_slice %181 {offsets = [0, 128], sizes = [8, 288], strides = [1, 1]} : vector<8x512xf32> to vector<8x288xf32>
    %189 = vector.extract_strided_slice %181 {offsets = [0, 129], sizes = [8, 288], strides = [1, 1]} : vector<8x512xf32> to vector<8x288xf32>
    %190 = vector.extract_strided_slice %181 {offsets = [0, 145], sizes = [8, 288], strides = [1, 1]} : vector<8x512xf32> to vector<8x288xf32>
    %191 = vector.extract_strided_slice %181 {offsets = [0, 146], sizes = [8, 288], strides = [1, 1]} : vector<8x512xf32> to vector<8x288xf32>
    %192 = vector.extract_strided_slice %181 {offsets = [0, 147], sizes = [8, 288], strides = [1, 1]} : vector<8x512xf32> to vector<8x288xf32>
    %193 = tpu.concatenate %184, %185, %186, %187, %188, %189, %190, %191, %192 in 0 : vector<8x288xf32>, vector<8x288xf32>, vector<8x288xf32>, vector<8x288xf32>, vector<8x288xf32>, vector<8x288xf32>, vector<8x288xf32>, vector<8x288xf32>, vector<8x288xf32> -> vector<72x288xf32>
    %cst_81 = arith.constant dense<0.000000e+00> : vector<4x288xf32>
    %194 = tpu.matmul %182, %193, %cst_81 {dimension_numbers = #tpu.dot_dimension_numbers<[1], [0], [0], [1], [0, 0, 1, 1], [], []>} : vector<4x72xf32>, vector<72x288xf32>, vector<4x288xf32> -> vector<4x288xf32>
    %195 = vector.broadcast %183 : vector<4x1xf32> to vector<4x288xf32>
    %196 = arith.addf %194, %195 : vector<4x288xf32>
    %cst_82 = arith.constant 0.000000e+00 : f32
    %197 = vector.shape_cast %21 : vector<1x288xi1> to vector<1x288xi1>
    %198 = vector.broadcast %197 : vector<1x288xi1> to vector<4x288xi1>
    %199 = vector.broadcast %cst_82 : f32 to vector<4x288xf32>
    %200 = arith.select %198, %196, %199 : vector<4x288xi1>, vector<4x288xf32>
    %c0_83 = arith.constant 0 : index
    %c0_84 = arith.constant 0 : index
    %c0_85 = arith.constant 0 : index
    %201 = vector.load %arg8[%c0_83, %c0_84, %c0_85] : memref<1x4x288xf32, #tpu.memory_space<vmem>>, vector<1x4x288xf32>
    %202 = vector.shape_cast %201 : vector<1x4x288xf32> to vector<4x288xf32>
    %203 = vector.shape_cast %200 : vector<4x288xf32> to vector<1x4x288xf32>
    tpu.vector_store %arg8[%c0_83, %c0_84, %c0_85], %203 {strides = array<i32>} : memref<1x4x288xf32, #tpu.memory_space<vmem>>, vector<1x4x288xf32>,
    return
  }
  func.func @transform_0(%arg0: i32) -> (i32, i32, i32) {
    %c0_i32 = arith.constant 0 : i32
    %c0_i32_0 = arith.constant 0 : i32
    %c0_i32_1 = arith.constant 0 : i32
    return %arg0, %c0_i32, %c0_i32_0 : i32, i32, i32
  }
  func.func @transform_1(%arg0: i32) -> (i32, i32) {
    %c0_i32 = arith.constant 0 : i32
    %c0_i32_0 = arith.constant 0 : i32
    %c0_i32_1 = arith.constant 0 : i32
    return %c0_i32, %c0_i32_0 : i32, i32
  }
  func.func @transform_2(%arg0: i32) -> (i32, i32) {
    %c0_i32 = arith.constant 0 : i32
    %c0_i32_0 = arith.constant 0 : i32
    %c0_i32_1 = arith.constant 0 : i32
    return %c0_i32, %c0_i32_0 : i32, i32
  }
  func.func @transform_3(%arg0: i32) -> (i32, i32, i32) {
    %c0_i32 = arith.constant 0 : i32
    %c0_i32_0 = arith.constant 0 : i32
    %c0_i32_1 = arith.constant 0 : i32
    %c0_i32_2 = arith.constant 0 : i32
    return %c0_i32, %c0_i32_0, %c0_i32_1 : i32, i32, i32
  }
  func.func @transform_4(%arg0: i32) -> (i32, i32, i32) {
    %c0_i32 = arith.constant 0 : i32
    %c0_i32_0 = arith.constant 0 : i32
    %c0_i32_1 = arith.constant 0 : i32
    %c0_i32_2 = arith.constant 0 : i32
    return %c0_i32, %c0_i32_0, %c0_i32_1 : i32, i32, i32
  }
  func.func @transform_5(%arg0: i32) -> (i32, i32) {
    %c0_i32 = arith.constant 0 : i32
    %c0_i32_0 = arith.constant 0 : i32
    %c0_i32_1 = arith.constant 0 : i32
    return %c0_i32, %c0_i32_0 : i32, i32
  }
  func.func @transform_6(%arg0: i32) -> (i32, i32) {
    %c0_i32 = arith.constant 0 : i32
    %c0_i32_0 = arith.constant 0 : i32
    %c0_i32_1 = arith.constant 0 : i32
    return %c0_i32, %c0_i32_0 : i32, i32
  }
  func.func @transform_7(%arg0: i32) -> (i32, i32, i32) {
    %c0_i32 = arith.constant 0 : i32
    %c0_i32_0 = arith.constant 0 : i32
    %c0_i32_1 = arith.constant 0 : i32
    return %arg0, %c0_i32, %c0_i32_0 : i32, i32, i32
  }
}

</mosaic_0001>

<llo_original>
// kernel: rcnn_forward.1
$region0: #{rcnn_forward.1}
  #allocation0 [shape = 'u32[]', space=smem, size = 0x4, offset = 0x4, fixed_abs, tag = 'smem constant byte address 0x4 - core index']
  #allocation1 [shape = 'u32[144,128]{1,0:T(1,128)}', space=vmem, size = 0x12000, scoped, tag = 'internal scratch']
  #allocation2 [shape = 'f32[8,512]{1,0:T(8,128)}', space=vmem, size = 0x4000, scoped, tag = 'scratch operand']
  #allocation3 [shape = 'f32[8,512]{1,0:T(8,128)}', space=vmem, size = 0x4000, scoped, tag = 'scratch operand']
  %s0 = inlined_call_operand.vmem [shape: f32[2,8,512], index: 0, kind: input, shape index: {}]
  %s1 = inlined_call_operand.vmem [shape: f32[8,72], index: 1, kind: input, shape index: {}]
  %s2 = inlined_call_operand.vmem [shape: f32[8,1], index: 2, kind: input, shape index: {}]
  %s3 = inlined_call_operand.vmem [shape: f32[4,8,72], index: 3, kind: input, shape index: {}]
  %s4 = inlined_call_operand.vmem [shape: f32[4,8,1], index: 4, kind: input, shape index: {}]
  %s5 = inlined_call_operand.vmem [shape: f32[4,72], index: 5, kind: input, shape index: {}]
  %s6 = inlined_call_operand.vmem [shape: f32[4,1], index: 6, kind: input, shape index: {}]
  %s7 = inlined_call_operand.vmem [shape: f32[2,4,288], index: 7, kind: output, shape index: {}]
  %s8 = sld [smem:[#allocation0]]
  $region61: #{rcnn_forward.1} parent=0
    _
  %s10 = ssub.s32 1, %s8
  %s11 = scalar_select 0, %s10, %s8
  loop: start=0, step=1, limit=4
  $region2: #{rcnn_forward.1} parent=0 // loop_pre_header
    _
  $region3: #{rcnn_forward.1} parent=0 // loop_header
    %s13 = sphi 0, %s17
    %p14 = scmp.ge.s32.totalorder %s13, 4
    %s23 = sphi 0, %s25
    %s26 = sphi 0, %s23
    %s27 = sphi 0, %s26
    %s43 = sphi 0, %s27
    %s47 = sphi 0, %s47
    %s49 = sphi 0, %s47
    %s50 = sphi 0, %s49
    %s64 = sphi 0, %s50
    %s68 = sphi 0, %s68
    %s70 = sphi 0, %s68
    %s71 = sphi 0, %s70
    %s85 = sphi 0, %s71
    %s89 = sphi 0, %s89
    %s91 = sphi 0, %s89
    %s92 = sphi 0, %s91
    %s106 = sphi 0, %s92
    %s110 = sphi 0, %s110
    %s112 = sphi 0, %s110
    %s113 = sphi 0, %s112
    %s127 = sphi 0, %s113
    %s131 = sphi 0, %s131
    %s133 = sphi 0, %s131
    %s134 = sphi 0, %s133
    %s148 = sphi 0, %s134
    %s152 = sphi 0, %s152
    %s154 = sphi 0, %s152
    %s155 = sphi 0, %s154
    %s169 = sphi 0, %s155
    %s175 = sphi 0, %s177
    %s178 = sphi 0, %s175
    %s179 = sphi 0, %s178
    %s195 = sphi 0, %s179
  $region4: #{rcnn_forward.1} parent=0 // loop_header_branch
    %16 = sbr.rel (%p14) target = $region8
  $region5: #{rcnn_forward.1} parent=0 // loop_body
    %s18 = ssub.s32 %s13, 1
    %s19 = ssub.s32 %s13, 2
    %s20 = sadd.s32 %s13, 1
    %s21 = ssub.s32 %s13, %s20
    %p22 = scmp.eq.s32.totalorder %s21, 0
    %s24 = sadd.s32 %s23, 1
    %s25 = scalar_select %p22, %s23, %s24
    %p28 = pneg %p22
    %p29 = scmp.eq.s32.totalorder %s13, 1
    %p30 = por %p28, %p29
    %p31 = scmp.ne.s32.totalorder %s23, %s26
    %p32 = scmp.eq.s32.totalorder %s13, 0
    %p33 = por %p31, %p32
    %p34 = scmp.ne.s32.totalorder %s23, %s26
    %p35 = scmp.eq.s32.totalorder %s18, 1
    %p36 = por %p34, %p35
    %p37 = scmp.ne.s32.totalorder %s26, %s27
    %p38 = scmp.eq.s32.totalorder %s18, 0
    %p39 = por %p37, %p38
    %p40 = scmp.ne.s32.totalorder %s26, %s27
    %p41 = scmp.eq.s32.totalorder %s19, 1
    %p42 = por %p40, %p41
    %p44 = scmp.ne.s32.totalorder %s27, %s43
    %p45 = scmp.eq.s32.totalorder %s19, 0
    %p46 = por %p44, %p45
    %s48 = sadd.s32 %s47, 1
    %p51 = scmp.eq.s32.totalorder %s13, 1
    %p52 = scmp.ne.s32.totalorder %s47, %s49
    %p53 = scmp.eq.s32.totalorder %s13, 0
    %p54 = por %p52, %p53
    %p55 = scmp.ne.s32.totalorder %s47, %s49
    %p56 = scmp.eq.s32.totalorder %s18, 1
    %p57 = por %p55, %p56
    %p58 = scmp.ne.s32.totalorder %s49, %s50
    %p59 = scmp.eq.s32.totalorder %s18, 0
    %p60 = por %p58, %p59
    %p61 = scmp.ne.s32.totalorder %s49, %s50
    %p62 = scmp.eq.s32.totalorder %s19, 1
    %p63 = por %p61, %p62
    %p65 = scmp.ne.s32.totalorder %s50, %s64
    %p66 = scmp.eq.s32.totalorder %s19, 0
    %p67 = por %p65, %p66
    %s69 = sadd.s32 %s68, 1
    %p72 = scmp.eq.s32.totalorder %s13, 1
    %p73 = scmp.ne.s32.totalorder %s68, %s70
    %p74 = scmp.eq.s32.totalorder %s13, 0
    %p75 = por %p73, %p74
    %p76 = scmp.ne.s32.totalorder %s68, %s70
    %p77 = scmp.eq.s32.totalorder %s18, 1
    %p78 = por %p76, %p77
    %p79 = scmp.ne.s32.totalorder %s70, %s71
    %p80 = scmp.eq.s32.totalorder %s18, 0
    %p81 = por %p79, %p80
    %p82 = scmp.ne.s32.totalorder %s70, %s71
    %p83 = scmp.eq.s32.totalorder %s19, 1
    %p84 = por %p82, %p83
    %p86 = scmp.ne.s32.totalorder %s71, %s85
    %p87 = scmp.eq.s32.totalorder %s19, 0
    %p88 = por %p86, %p87
    %s90 = sadd.s32 %s89, 1
    %p93 = scmp.eq.s32.totalorder %s13, 1
    %p94 = scmp.ne.s32.totalorder %s89, %s91
    %p95 = scmp.eq.s32.totalorder %s13, 0
    %p96 = por %p94, %p95
    %p97 = scmp.ne.s32.totalorder %s89, %s91
    %p98 = scmp.eq.s32.totalorder %s18, 1
    %p99 = por %p97, %p98
    %p100 = scmp.ne.s32.totalorder %s91, %s92
    %p101 = scmp.eq.s32.totalorder %s18, 0
    %p102 = por %p100, %p101
    %p103 = scmp.ne.s32.totalorder %s91, %s92
    %p104 = scmp.eq.s32.totalorder %s19, 1
    %p105 = por %p103, %p104
    %p107 = scmp.ne.s32.totalorder %s92, %s106
    %p108 = scmp.eq.s32.totalorder %s19, 0
    %p109 = por %p107, %p108
    %s111 = sadd.s32 %s110, 1
    %p114 = scmp.eq.s32.totalorder %s13, 1
    %p115 = scmp.ne.s32.totalorder %s110, %s112
    %p116 = scmp.eq.s32.totalorder %s13, 0
    %p117 = por %p115, %p116
    %p118 = scmp.ne.s32.totalorder %s110, %s112
    %p119 = scmp.eq.s32.totalorder %s18, 1
    %p120 = por %p118, %p119
    %p121 = scmp.ne.s32.totalorder %s112, %s113
    %p122 = scmp.eq.s32.totalorder %s18, 0
    %p123 = por %p121, %p122
    %p124 = scmp.ne.s32.totalorder %s112, %s113
    %p125 = scmp.eq.s32.totalorder %s19, 1
    %p126 = por %p124, %p125
    %p128 = scmp.ne.s32.totalorder %s113, %s127
    %p129 = scmp.eq.s32.totalorder %s19, 0
    %p130 = por %p128, %p129
    %s132 = sadd.s32 %s131, 1
    %p135 = scmp.eq.s32.totalorder %s13, 1
    %p136 = scmp.ne.s32.totalorder %s131, %s133
    %p137 = scmp.eq.s32.totalorder %s13, 0
    %p138 = por %p136, %p137
    %p139 = scmp.ne.s32.totalorder %s131, %s133
    %p140 = scmp.eq.s32.totalorder %s18, 1
    %p141 = por %p139, %p140
    %p142 = scmp.ne.s32.totalorder %s133, %s134
    %p143 = scmp.eq.s32.totalorder %s18, 0
    %p144 = por %p142, %p143
    %p145 = scmp.ne.s32.totalorder %s133, %s134
    %p146 = scmp.eq.s32.totalorder %s19, 1
    %p147 = por %p145, %p146
    %p149 = scmp.ne.s32.totalorder %s134, %s148
    %p150 = scmp.eq.s32.totalorder %s19, 0
    %p151 = por %p149, %p150
    %s153 = sadd.s32 %s152, 1
    %p156 = scmp.eq.s32.totalorder %s13, 1
    %p157 = scmp.ne.s32.totalorder %s152, %s154
    %p158 = scmp.eq.s32.totalorder %s13, 0
    %p159 = por %p157, %p158
    %p160 = scmp.ne.s32.totalorder %s152, %s154
    %p161 = scmp.eq.s32.totalorder %s18, 1
    %p162 = por %p160, %p161
    %p163 = scmp.ne.s32.totalorder %s154, %s155
    %p164 = scmp.eq.s32.totalorder %s18, 0
    %p165 = por %p163, %p164
    %p166 = scmp.ne.s32.totalorder %s154, %s155
    %p167 = scmp.eq.s32.totalorder %s19, 1
    %p168 = por %p166, %p167
    %p170 = scmp.ne.s32.totalorder %s155, %s169
    %p171 = scmp.eq.s32.totalorder %s19, 0
    %p172 = por %p170, %p171
    %s173 = ssub.s32 %s13, %s20
    %p174 = scmp.eq.s32.totalorder %s173, 0
    %s176 = sadd.s32 %s175, 1
    %s177 = scalar_select %p174, %s175, %s176
    %p180 = pneg %p174
    %p181 = scmp.eq.s32.totalorder %s13, 1
    %p182 = por %p180, %p181
    %p183 = scmp.ne.s32.totalorder %s175, %s178
    %p184 = scmp.eq.s32.totalorder %s13, 0
    %p185 = por %p183, %p184
    %p186 = scmp.ne.s32.totalorder %s175, %s178
    %p187 = scmp.eq.s32.totalorder %s18, 1
    %p188 = por %p186, %p187
    %p189 = scmp.ne.s32.totalorder %s178, %s179
    %p190 = scmp.eq.s32.totalorder %s18, 0
    %p191 = por %p189, %p190
    %p192 = scmp.ne.s32.totalorder %s178, %s179
    %p193 = scmp.eq.s32.totalorder %s19, 1
    %p194 = por %p192, %p193
    %p196 = scmp.ne.s32.totalorder %s179, %s195
    %p197 = scmp.eq.s32.totalorder %s19, 0
    %p198 = por %p196, %p197
    %p199 = scmp.le.s32.totalorder 1, %s13
    %p200 = scmp.lt.s32.totalorder %s13, 3
    %p201 = pnand %p199, %p200
    %p202 = pneg %p201
    // Predicated region
    $region9: #{rcnn_forward.1} parent=5 // pred_check
      _
    $region10: #{rcnn_forward.1} parent=5 // pred_check_branch
      %204 = sbr.rel (%p201) target = $region12
    $region11: #{rcnn_forward.1} parent=5 // pred_region
      %s205 = ssub.s32 %s13, 1
      // Predicated region
      $region13: #{rcnn_forward.1} parent=11 // pred_check
        %p206 = pneg %p60
      $region14: #{rcnn_forward.1} parent=11 // pred_check_branch
        %208 = sbr.rel (%p206) target = $region16
      $region15: #{rcnn_forward.1} parent=11 // pred_region
        _
      $region16: #{rcnn_forward.1} parent=11 // pred_fallthru
        _
      // Predicated region
      $region17: #{rcnn_forward.1} parent=11 // pred_check
        %p209 = pneg %p81
      $region18: #{rcnn_forward.1} parent=11 // pred_check_branch
        %211 = sbr.rel (%p209) target = $region20
      $region19: #{rcnn_forward.1} parent=11 // pred_region
        _
      $region20: #{rcnn_forward.1} parent=11 // pred_fallthru
        _
      // Predicated region
      $region21: #{rcnn_forward.1} parent=11 // pred_check
        %p212 = pneg %p102
      $region22: #{rcnn_forward.1} parent=11 // pred_check_branch
        %214 = sbr.rel (%p212) target = $region24
      $region23: #{rcnn_forward.1} parent=11 // pred_region
        _
      $region24: #{rcnn_forward.1} parent=11 // pred_fallthru
        _
      // Predicated region
      $region25: #{rcnn_forward.1} parent=11 // pred_check
        %p215 = pneg %p123
      $region26: #{rcnn_forward.1} parent=11 // pred_check_branch
        %217 = sbr.rel (%p215) target = $region28
      $region27: #{rcnn_forward.1} parent=11 // pred_region
        _
      $region28: #{rcnn_forward.1} parent=11 // pred_fallthru
        _
      // Predicated region
      $region29: #{rcnn_forward.1} parent=11 // pred_check
        %p218 = pneg %p144
      $region30: #{rcnn_forward.1} parent=11 // pred_check_branch
        %220 = sbr.rel (%p218) target = $region32
      $region31: #{rcnn_forward.1} parent=11 // pred_region
        _
      $region32: #{rcnn_forward.1} parent=11 // pred_fallthru
        _
      // Predicated region
      $region33: #{rcnn_forward.1} parent=11 // pred_check
        %p221 = pneg %p165
      $region34: #{rcnn_forward.1} parent=11 // pred_check_branch
        %223 = sbr.rel (%p221) target = $region36
      $region35: #{rcnn_forward.1} parent=11 // pred_region
        _
      $region36: #{rcnn_forward.1} parent=11 // pred_fallthru
        _
    $region12: #{rcnn_forward.1} parent=5 // pred_fallthru
      _
    %p224 = scmp.lt.s32.totalorder %s13, 2
    // Predicated region
    $region37: #{rcnn_forward.1} parent=5 // pred_check
      %p225 = pneg %p224
    $region38: #{rcnn_forward.1} parent=5 // pred_check_branch
      %227 = sbr.rel (%p225) target = $region40
    $region39: #{rcnn_forward.1} parent=5 // pred_region
      // Predicated region
      $region41: #{rcnn_forward.1} parent=39 // pred_check
        %p228 = pneg %p33
      $region42: #{rcnn_forward.1} parent=39 // pred_check_branch
        %230 = sbr.rel (%p228) target = $region44
      $region43: #{rcnn_forward.1} parent=39 // pred_region
        %p231 = scmp.lt.s32.totalorder %s13, 1
        %s232 = scalar_select %p231, %s13, 1
        %s233 = smul.addr %s232, 4
        %s234 = smul.addr %s233, 8
        %s235 = scalar_lea.vmem %s0, %s234
      $region44: #{rcnn_forward.1} parent=39 // pred_fallthru
        _
    $region40: #{rcnn_forward.1} parent=5 // pred_fallthru
      _
    %p236 = scmp.le.s32.totalorder 1, %s13
    %p237 = scmp.lt.s32.totalorder %s13, 3
    %p238 = pnand %p236, %p237
    %p239 = pneg %p238
    // Predicated region
    $region45: #{rcnn_forward.1} parent=5 // pred_check
      _
    $region46: #{rcnn_forward.1} parent=5 // pred_check_branch
      %241 = sbr.rel (%p238) target = $region48
    $region47: #{rcnn_forward.1} parent=5 // pred_region
      %s242 = ssub.s32 %s13, 1
      %p243 = scmp.lt.s32.totalorder %s18, 1
      %s244 = scalar_select %p243, %s18, 1
      %s245 = smul.addr %s244, 4
      %s246 = smul.addr %s245, 8
      %s247 = scalar_lea.vmem %s0, %s246
      %p248 = pneg %p39
      %p249 = pneg %p36
      %p250 = pneg %p60
      %p251 = pneg %p57
      %p252 = pneg %p81
      %p253 = pneg %p78
      %p254 = pneg %p102
      %p255 = pneg %p99
      %p256 = pneg %p123
      %p257 = pneg %p120
      %p258 = pneg %p144
      %p259 = pneg %p141
      %p260 = pneg %p165
      %p261 = pneg %p162
      %p262 = pneg %p191
      %p263 = pneg %p188
      %p264 = scmp.lt.s32.totalorder %s18, 1
      %s265 = scalar_select %p264, %s18, 1
      %s266 = smul.addr %s265, 3
      %s267 = smul.addr %s266, 4
      %s268 = scalar_lea.vmem %s7, %s267
      %p269 = scmp.lt.s32.totalorder %s18, 1
      %s270 = scalar_select %p269, %s18, 1
      %s271 = smul.addr %s270, 4
      %s272 = smul.addr %s271, 8
      %s273 = scalar_lea.vmem %s0, %s272
      %p274 = scmp.lt.s32.totalorder %s18, 1
      %s275 = scalar_select %p274, %s18, 1
      %s276 = smul.addr %s275, 3
      %s277 = smul.addr %s276, 4
      %s278 = scalar_lea.vmem %s7, %s277
      %v279 = vlaneseq
      %v280 = vand.u32 %v279, 127
      %v281 = vadd.s32 %v280, 128
      %v282 = vadd.s32 %v280, 256
      %vm283 = vcmp.lt.s32.totalorder %v280, 0
      %v284 = vsub.s32 0, %v280
      %v285 = vsel %vm283, %v284, %v280
      %v286 = vmul.u32.u64.compose %v285, 3817748708
      %v287 = vextract.low.u32 %v286
      %v288 = vextract.high.u32 %v286
      %v289 = vshrl.u32 %v288, 4
      %v290 = vmul.u32 %v289, 18
      %v291 = vsub.s32 %v285, %v290
      %v292 = vsub.s32 0, %v291
      %v293 = vsel %vm283, %v292, %v291
      %vm294 = vcmp.lt.s32.totalorder %v281, 0
      %v295 = vsub.s32 0, %v281
      %v296 = vsel %vm294, %v295, %v281
      %v297 = vmul.u32.u64.compose %v296, 3817748708
      %v298 = vextract.low.u32 %v297
      %v299 = vextract.high.u32 %v297
      %v300 = vshrl.u32 %v299, 4
      %v301 = vmul.u32 %v300, 18
      %v302 = vsub.s32 %v296, %v301
      %v303 = vsub.s32 0, %v302
      %v304 = vsel %vm294, %v303, %v302
      %vm305 = vcmp.lt.s32.totalorder %v282, 0
      %v306 = vsub.s32 0, %v282
      %v307 = vsel %vm305, %v306, %v282
      %v308 = vmul.u32.u64.compose %v307, 3817748708
      %v309 = vextract.low.u32 %v308
      %v310 = vextract.high.u32 %v308
      %v311 = vshrl.u32 %v310, 4
      %v312 = vmul.u32 %v311, 18
      %v313 = vsub.s32 %v307, %v312
      %v314 = vsub.s32 0, %v313
      %v315 = vsel %vm305, %v314, %v313
      %vm316 = vcmp.ne.s32.totalorder %v293, 0
      %vm317 = vcmp.ne.s32.totalorder %v304, 0
      %vm318 = vcmp.ne.s32.totalorder %v315, 0
      %vm319 = vcmp.lt.s32.totalorder %v293, 0
      %vm320 = vcmp.lt.s32.totalorder %v304, 0
      %vm321 = vcmp.lt.s32.totalorder %v315, 0
      %vm322 = vmand %vm319, %vm316
      %vm323 = vmand %vm320, %vm317
      %vm324 = vmand %vm321, %vm318
      %v325 = vadd.s32 %v293, 18
      %v326 = vadd.s32 %v304, 18
      %v327 = vadd.s32 %v315, 18
      %v328 = vsel %vm322, %v325, %v293
      %v329 = vsel %vm323, %v326, %v304
      %v330 = vsel %vm324, %v327, %v315
      %vm331 = vcmp.ge.s32.totalorder %v328, 1
      %vm332 = vcmp.ge.s32.totalorder %v329, 1
      %vm333 = vcmp.ge.s32.totalorder %v330, 1
      %vm334 = vcmp.lt.s32.totalorder %v328, 17
      %vm335 = vcmp.lt.s32.totalorder %v329, 17
      %vm336 = vcmp.lt.s32.totalorder %v330, 17
      %vm337 = vmand %vm331, %vm334
      %vm338 = vmand %vm332, %vm335
      %vm339 = vmand %vm333, %vm336
      %340 = vst [vmem:[#allocation2] sm:$0xff] 0.0
      %341 = vst [vmem:[#allocation2 + $0x8] sm:$0xff] 0.0
      %342 = vst [vmem:[#allocation2 + $0x10] sm:$0xff] 0.0
      %343 = vst [vmem:[#allocation2 + $0x18] sm:$0xff] 0.0
      %344 = vst [vmem:[#allocation3] sm:$0xff] 0.0
      %345 = vst [vmem:[#allocation3 + $0x8] sm:$0xff] 0.0
      %346 = vst [vmem:[#allocation3 + $0x10] sm:$0xff] 0.0
      %347 = vst [vmem:[#allocation3 + $0x18] sm:$0xff] 0.0
      %v348 = vld [vmem:[%s273] sm:$0xff]
      %v349 = vld [vmem:[%s273 + $0x8] sm:$0xff]
      %v350 = vld [vmem:[%s273 + $0x10] sm:$0xff]
      %v351 = vld [vmem:[%s273 + $0x18] sm:$0xff]
      %v352 = vld [vmem:[%s1] sm:$0xff]
      %v353 = vld [vmem:[%s2] sm:$0xff]
      %358 = vrot.lane.b32.xlu0 %v348, 127
      %v359 = vpop.permute.xlu0 %358
      %360 = vrot.lane.b32.xlu0 %v349, 127
      %v361 = vpop.permute.xlu0 %360
      %362 = vrot.lane.b32.xlu0 %v350, 127
      %v363 = vpop.permute.xlu0 %362
      %364 = vrot.lane.b32.xlu0 %v351, 127
      %v365 = vpop.permute.xlu0 %364
      %vm366 = vcmask 1039360
      %v367 = vsel %vm366, %v359, %v361
      %v368 = vsel %vm366, %v361, %v363
      %v369 = vsel %vm366, %v363, %v365
      %370 = vrot.lane.b32.xlu0 %v348, 126
      %v371 = vpop.permute.xlu0 %370
      %372 = vrot.lane.b32.xlu0 %v349, 126
      %v373 = vpop.permute.xlu0 %372
      %374 = vrot.lane.b32.xlu0 %v350, 126
      %v375 = vpop.permute.xlu0 %374
      %376 = vrot.lane.b32.xlu0 %v351, 126
      %v377 = vpop.permute.xlu0 %376
      %vm378 = vcmask 1031168
      %v379 = vsel %vm378, %v371, %v373
      %v380 = vsel %vm378, %v373, %v375
      %v381 = vsel %vm378, %v375, %v377
      %382 = vrot.lane.b32.xlu0 %v348, 110
      %v383 = vpop.permute.xlu0 %382
      %384 = vrot.lane.b32.xlu0 %v349, 110
      %v385 = vpop.permute.xlu0 %384
      %386 = vrot.lane.b32.xlu0 %v350, 110
      %v387 = vpop.permute.xlu0 %386
      %388 = vrot.lane.b32.xlu0 %v351, 110
      %v389 = vpop.permute.xlu0 %388
      %vm390 = vcmask 900096
      %v391 = vsel %vm390, %v383, %v385
      %v392 = vsel %vm390, %v385, %v387
      %v393 = vsel %vm390, %v387, %v389
      %394 = vrot.lane.b32.xlu0 %v349, 109
      %v395 = vpop.permute.xlu0 %394
      %396 = vrot.lane.b32.xlu0 %v350, 109
      %v397 = vpop.permute.xlu0 %396
      %398 = vrot.lane.b32.xlu0 %v351, 109
      %v399 = vpop.permute.xlu0 %398
      %vm400 = vcmask 891904
      %v401 = vsel %vm400, %v395, %v397
      %v402 = vsel %vm400, %v397, %v399
      %403 = vrot.lane.b32.xlu0 %v349, 108
      %v404 = vpop.permute.xlu0 %403
      %405 = vrot.lane.b32.xlu0 %v350, 108
      %v406 = vpop.permute.xlu0 %405
      %407 = vrot.lane.b32.xlu0 %v351, 108
      %v408 = vpop.permute.xlu0 %407
      %vm409 = vcmask 883712
      %v410 = vsel %vm409, %v404, %v406
      %v411 = vsel %vm409, %v406, %v408
      %412 = vrot.lane.b32.xlu0 %v349, 92
      %v413 = vpop.permute.xlu0 %412
      %414 = vrot.lane.b32.xlu0 %v350, 92
      %v415 = vpop.permute.xlu0 %414
      %416 = vrot.lane.b32.xlu0 %v351, 92
      %v417 = vpop.permute.xlu0 %416
      %vm418 = vcmask 752640
      %v419 = vsel %vm418, %v413, %v415
      %v420 = vsel %vm418, %v415, %v417
      %421 = vrot.lane.b32.xlu0 %v349, 91
      %v422 = vpop.permute.xlu0 %421
      %423 = vrot.lane.b32.xlu0 %v350, 91
      %v424 = vpop.permute.xlu0 %423
      %425 = vrot.lane.b32.xlu0 %v351, 91
      %v426 = vpop.permute.xlu0 %425
      %vm427 = vcmask 744448
      %v428 = vsel %vm427, %v422, %v424
      %v429 = vsel %vm427, %v424, %v426
      %430 = vrot.lane.b32.xlu0 %v349, 90
      %v431 = vpop.permute.xlu0 %430
      %432 = vrot.lane.b32.xlu0 %v350, 90
      %v433 = vpop.permute.xlu0 %432
      %434 = vrot.lane.b32.xlu0 %v351, 90
      %v435 = vpop.permute.xlu0 %434
      %vm436 = vcmask 736256
      %v437 = vsel %vm436, %v431, %v433
      %v438 = vsel %vm436, %v433, %v435
      %440 = vset.pattern.permute.xlu0 0
      %441 = vperm.xlu0 %440, %v353
      %v442 = vpop.permute.xlu0 %441
      %444 = vrot.lane.b32.xlu0 %v348, 19
      %v445 = vpop.permute.xlu0 %444
      %446 = vrot.lane.b32.xlu0 %v349, 19
      %v447 = vpop.permute.xlu0 %446
      %448 = vrot.lane.b32.xlu0 %v350, 19
      %v449 = vpop.permute.xlu0 %448
      %450 = vrot.lane.b32.xlu0 %v351, 19
      %v451 = vpop.permute.xlu0 %450
      %452 = vrot.lane.b32.xlu0 %v367, 19
      %v453 = vpop.permute.xlu0 %452
      %454 = vrot.lane.b32.xlu0 %v368, 19
      %v455 = vpop.permute.xlu0 %454
      %456 = vrot.lane.b32.xlu0 %v369, 19
      %v457 = vpop.permute.xlu0 %456
      %458 = vrot.lane.b32.xlu0 %v365, 19
      %v459 = vpop.permute.xlu0 %458
      %460 = vrot.lane.b32.xlu0 %v379, 19
      %v461 = vpop.permute.xlu0 %460
      %462 = vrot.lane.b32.xlu0 %v380, 19
      %v463 = vpop.permute.xlu0 %462
      %464 = vrot.lane.b32.xlu0 %v381, 19
      %v465 = vpop.permute.xlu0 %464
      %466 = vrot.lane.b32.xlu0 %v377, 19
      %v467 = vpop.permute.xlu0 %466
      %468 = vrot.lane.b32.xlu0 %v391, 19
      %v469 = vpop.permute.xlu0 %468
      %470 = vrot.lane.b32.xlu0 %v392, 19
      %v471 = vpop.permute.xlu0 %470
      %472 = vrot.lane.b32.xlu0 %v393, 19
      %v473 = vpop.permute.xlu0 %472
      %474 = vrot.lane.b32.xlu0 %v389, 19
      %v475 = vpop.permute.xlu0 %474
      %476 = vrot.lane.b32.xlu0 %v395, 19
      %v477 = vpop.permute.xlu0 %476
      %478 = vrot.lane.b32.xlu0 %v401, 19
      %v479 = vpop.permute.xlu0 %478
      %480 = vrot.lane.b32.xlu0 %v402, 19
      %v481 = vpop.permute.xlu0 %480
      %482 = vrot.lane.b32.xlu0 %v399, 19
      %v483 = vpop.permute.xlu0 %482
      %484 = vrot.lane.b32.xlu0 %v404, 19
      %v485 = vpop.permute.xlu0 %484
      %486 = vrot.lane.b32.xlu0 %v410, 19
      %v487 = vpop.permute.xlu0 %486
      %488 = vrot.lane.b32.xlu0 %v411, 19
      %v489 = vpop.permute.xlu0 %488
      %490 = vrot.lane.b32.xlu0 %v408, 19
      %v491 = vpop.permute.xlu0 %490
      %492 = vrot.lane.b32.xlu0 %v413, 19
      %v493 = vpop.permute.xlu0 %492
      %494 = vrot.lane.b32.xlu0 %v419, 19
      %v495 = vpop.permute.xlu0 %494
      %496 = vrot.lane.b32.xlu0 %v420, 19
      %v497 = vpop.permute.xlu0 %496
      %498 = vrot.lane.b32.xlu0 %v417, 19
      %v499 = vpop.permute.xlu0 %498
      %500 = vrot.lane.b32.xlu0 %v422, 19
      %v501 = vpop.permute.xlu0 %500
      %502 = vrot.lane.b32.xlu0 %v428, 19
      %v503 = vpop.permute.xlu0 %502
      %504 = vrot.lane.b32.xlu0 %v429, 19
      %v505 = vpop.permute.xlu0 %504
      %506 = vrot.lane.b32.xlu0 %v426, 19
      %v507 = vpop.permute.xlu0 %506
      %508 = vrot.lane.b32.xlu0 %v431, 19
      %v509 = vpop.permute.xlu0 %508
      %510 = vrot.lane.b32.xlu0 %v437, 19
      %v511 = vpop.permute.xlu0 %510
      %512 = vrot.lane.b32.xlu0 %v438, 19
      %v513 = vpop.permute.xlu0 %512
      %514 = vrot.lane.b32.xlu0 %v435, 19
      %v515 = vpop.permute.xlu0 %514
      %vm516 = vcmask 154624
      %v517 = vsel %vm516, %v445, %v447
      %v518 = vsel %vm516, %v447, %v449
      %v519 = vsel %vm516, %v449, %v451
      %v520 = vsel %vm516, %v453, %v455
      %v521 = vsel %vm516, %v455, %v457
      %v522 = vsel %vm516, %v457, %v459
      %v523 = vsel %vm516, %v461, %v463
      %v524 = vsel %vm516, %v463, %v465
      %v525 = vsel %vm516, %v465, %v467
      %v526 = vsel %vm516, %v469, %v471
      %v527 = vsel %vm516, %v471, %v473
      %v528 = vsel %vm516, %v473, %v475
      %v529 = vsel %vm516, %v477, %v479
      %v530 = vsel %vm516, %v479, %v481
      %v531 = vsel %vm516, %v481, %v483
      %v532 = vsel %vm516, %v485, %v487
      %v533 = vsel %vm516, %v487, %v489
      %v534 = vsel %vm516, %v489, %v491
      %v535 = vsel %vm516, %v493, %v495
      %v536 = vsel %vm516, %v495, %v497
      %v537 = vsel %vm516, %v497, %v499
      %v538 = vsel %vm516, %v501, %v503
      %v539 = vsel %vm516, %v503, %v505
      %v540 = vsel %vm516, %v505, %v507
      %v541 = vsel %vm516, %v509, %v511
      %v542 = vsel %vm516, %v511, %v513
      %v543 = vsel %vm516, %v513, %v515
      %vm571 = vcmask 588800
      %v573 = vsel %vm571, %v352, 0
      %575 = vmatprep.subr.mxu0 %v518
      %576 = vmatpush1.msra.mxu0 %v517
      %577 = vmatprep.subr.mxu0 %v521
      %578 = vmatpush1.msra.mxu0 %v520
      %579 = vmatprep.subr.mxu0 %v524
      %580 = vmatpush1.msra.mxu0 %v523
      %581 = vmatprep.subr.mxu0 %v527
      %582 = vmatpush1.msra.mxu0 %v526
      %583 = vmatprep.subr.mxu0 %v530
      %584 = vmatpush1.msra.mxu0 %v529
      %585 = vmatprep.subr.mxu0 %v533
      %586 = vmatpush1.msra.mxu0 %v532
      %587 = vmatprep.subr.mxu0 %v536
      %588 = vmatpush1.msra.mxu0 %v535
      %589 = vmatprep.subr.mxu0 %v539
      %590 = vmatpush1.msra.mxu0 %v538
      %591 = vmatprep.subr.mxu0 %v542
      %592 = vmatpush1.msra.mxu0 %v541
      %593 = vmatprep.subr.mxu0 0.0
      %594 = vmatpush1.msra.mxu0 0.0
      %595 = vmatprep.subr.mxu0 0.0
      %596 = vmatpush1.msra.mxu0 0.0
      %597 = vmatprep.subr.mxu0 0.0
      %598 = vmatpush1.msra.mxu0 0.0
      %599 = vmatprep.subr.mxu0 0.0
      %600 = vmatpush1.msra.mxu0 0.0
      %601 = vmatprep.subr.mxu0 0.0
      %602 = vmatpush1.msra.mxu0 0.0
      %603 = vmatprep.subr.mxu0 0.0
      %604 = vmatpush1.msra.mxu0 0.0
      %605 = vmatprep.subr.mxu0 0.0
      %606 = vmatpush1.msra.mxu0 0.0
      %607 = vmatprep.subr.mxu0 0.0
      %608 = vmatpush1.msra.mxu0 0.0
      %609 = vmatprep.subr.mxu0 0.0
      %610 = vmatpush1.msra.mxu0 0.0
      %611 = vmatprep.subr.mxu0 0.0
      %612 = vmatpush1.msra.mxu0 0.0
      %613 = vmatprep.subr.mxu0 0.0
      %614 = vmatpush1.msra.mxu0 0.0
      %615 = vmatprep.subr.mxu0 0.0
      %616 = vmatpush1.msra.mxu0 0.0
      %617 = vmatprep.subr.mxu0 0.0
      %618 = vmatpush1.msra.mxu0 0.0
      %619 = vmatprep.subr.mxu0 0.0
      %620 = vmatpush1.msra.mxu0 0.0
      %621 = vmatprep.subr.mxu0 0.0
      %622 = vmatpush1.msra.mxu0 0.0
      %623 = vmatprep.subr.mxu0 0.0
      %624 = vmatpush1.msra.mxu0 0.0
      %625 = vmatprep.subr.mxu0 0.0
      %626 = vmatpush1.msra.mxu0 0.0
      %627 = vmatprep.subr.mxu0 0.0
      %628 = vmatpush1.msra.mxu0 0.0
      %629 = vmatprep.subr.mxu0 0.0
      %630 = vmatpush1.msra.mxu0 0.0
      %631 = vmatprep.subr.mxu0 0.0
      %632 = vmatpush1.msra.mxu0 0.0
      %633 = vmatprep.subr.mxu0 0.0
      %634 = vmatpush1.msra.mxu0 0.0
      %635 = vmatprep.subr.mxu0 0.0
      %636 = vmatpush1.msra.mxu0 0.0
      %637 = vmatprep.subr.mxu0 0.0
      %638 = vmatpush1.msra.mxu0 0.0
      %639 = vmatprep.mubr.f32.mxu0 0.0
      %640 = vmatmul.mubr.f32.gmra.mrb[0].mxu0 %v573
      %v641 = vpop.f32.mrb[0].mxu0
      %v642 = vadd.f32 %v442, %v641
      %v643 = vpop.f32.mrb[0].mxu0
      %v644 = vadd.f32 %v442, %v643
      %645 = vdwg.mxu0
      %646 = vmatprep.subr.mxu0 0.0
      %647 = vmatpush1.msra.mxu0 %v519
      %648 = vmatprep.subr.mxu0 0.0
      %649 = vmatpush1.msra.mxu0 %v522
      %650 = vmatprep.subr.mxu0 0.0
      %651 = vmatpush1.msra.mxu0 %v525
      %652 = vmatprep.subr.mxu0 0.0
      %653 = vmatpush1.msra.mxu0 %v528
      %654 = vmatprep.subr.mxu0 0.0
      %655 = vmatpush1.msra.mxu0 %v531
      %656 = vmatprep.subr.mxu0 0.0
      %657 = vmatpush1.msra.mxu0 %v534
      %658 = vmatprep.subr.mxu0 0.0
      %659 = vmatpush1.msra.mxu0 %v537
      %660 = vmatprep.subr.mxu0 0.0
      %661 = vmatpush1.msra.mxu0 %v540
      %662 = vmatprep.subr.mxu0 0.0
      %663 = vmatpush1.msra.mxu0 %v543
      %664 = vmatprep.subr.mxu0 0.0
      %665 = vmatpush1.msra.mxu0 0.0
      %666 = vmatprep.subr.mxu0 0.0
      %667 = vmatpush1.msra.mxu0 0.0
      %668 = vmatprep.subr.mxu0 0.0
      %669 = vmatpush1.msra.mxu0 0.0
      %670 = vmatprep.subr.mxu0 0.0
      %671 = vmatpush1.msra.mxu0 0.0
      %672 = vmatprep.subr.mxu0 0.0
      %673 = vmatpush1.msra.mxu0 0.0
      %674 = vmatprep.subr.mxu0 0.0
      %675 = vmatpush1.msra.mxu0 0.0
      %676 = vmatprep.subr.mxu0 0.0
      %677 = vmatpush1.msra.mxu0 0.0
      %678 = vmatprep.subr.mxu0 0.0
      %679 = vmatpush1.msra.mxu0 0.0
      %680 = vmatprep.subr.mxu0 0.0
      %681 = vmatpush1.msra.mxu0 0.0
      %682 = vmatprep.subr.mxu0 0.0
      %683 = vmatpush1.msra.mxu0 0.0
      %684 = vmatprep.subr.mxu0 0.0
      %685 = vmatpush1.msra.mxu0 0.0
      %686 = vmatprep.subr.mxu0 0.0
      %687 = vmatpush1.msra.mxu0 0.0
      %688 = vmatprep.subr.mxu0 0.0
      %689 = vmatpush1.msra.mxu0 0.0
      %690 = vmatprep.subr.mxu0 0.0
      %691 = vmatpush1.msra.mxu0 0.0
      %692 = vmatprep.subr.mxu0 0.0
      %693 = vmatpush1.msra.mxu0 0.0
      %694 = vmatprep.subr.mxu0 0.0
      %695 = vmatpush1.msra.mxu0 0.0
      %696 = vmatprep.subr.mxu0 0.0
      %697 = vmatpush1.msra.mxu0 0.0
      %698 = vmatprep.subr.mxu0 0.0
      %699 = vmatpush1.msra.mxu0 0.0
      %700 = vmatprep.subr.mxu0 0.0
      %701 = vmatpush1.msra.mxu0 0.0
      %702 = vmatprep.subr.mxu0 0.0
      %703 = vmatpush1.msra.mxu0 0.0
      %704 = vmatprep.subr.mxu0 0.0
      %705 = vmatpush1.msra.mxu0 0.0
      %706 = vmatprep.subr.mxu0 0.0
      %707 = vmatpush1.msra.mxu0 0.0
      %708 = vmatprep.subr.mxu0 0.0
      %709 = vmatpush1.msra.mxu0 0.0
      %710 = vmatprep.mubr.f32.mxu0 0.0
      %711 = vmatmul.mubr.f32.gmra.mrb[0].mxu0 %v573
      %v712 = vpop.f32.mrb[0].mxu0
      %v713 = vadd.f32 %v442, %v712
      %v714 = vpop.f32.mrb[0].mxu0
      %715 = vdwg.mxu0
      %v716 = vsel %vm337, 1, 0
      %v717 = vsel %vm338, 1, 0
      %v718 = vsel %vm339, 1, 0
      %vm719 = vcmp.eq.s32.totalorder %v716, 1
      %vm720 = vcmp.eq.s32.totalorder %v717, 1
      %vm721 = vcmp.eq.s32.totalorder %v718, 1
      %v722 = vsel %vm719, %v642, 0.0
      %v723 = vsel %vm720, %v644, 0.0
      %v724 = vsel %vm721, %v713, 0.0
      %v725 = vadd.f32 %v722, %v723
      %vm726 = vcmask 261120
      %v727 = vsel %vm726, %v724, 0.0
      %v728 = vadd.f32 %v725, %v727
      %729 = vadd.xlane.f32.xlu0 %v728
      %v730 = vpop.xlane.xlu0 %729
      %v731 = vrot.slane %v730, 4
      %v732 = vadd.f32 %v730, %v731
      %v733 = vrot.slane %v732, 2
      %v734 = vadd.f32 %v732, %v733
      %v735 = vrot.slane %v734, 1
      %v736 = vadd.f32 %v734, %v735
      %s737 = vtos %v736
      %v738 = vrcp.pop 2048.0
      %s739 = vtos %v738
      %s740 = smul.f32 %s737, %s739
      %v741 = vstv %s740
      %v742 = vsub.f32 %v722, %v741
      %v743 = vsub.f32 %v723, %v741
      %v744 = vsub.f32 %v724, %v741
      %v745 = vmul.f32 %v742, %v742
      %v746 = vmul.f32 %v743, %v743
      %v747 = vmul.f32 %v744, %v744
      %v748 = vsel %vm719, %v745, 0.0
      %v749 = vsel %vm720, %v746, 0.0
      %v750 = vsel %vm721, %v747, 0.0
      %v751 = vadd.f32 %v748, %v749
      %v752 = vsel %vm726, %v750, 0.0
      %v753 = vadd.f32 %v751, %v752
      %754 = vadd.xlane.f32.xlu0 %v753
      %v755 = vpop.xlane.xlu0 %754
      %v756 = vrot.slane %v755, 4
      %v757 = vadd.f32 %v755, %v756
      %v758 = vrot.slane %v757, 2
      %v759 = vadd.f32 %v757, %v758
      %v760 = vrot.slane %v759, 1
      %v761 = vadd.f32 %v759, %v760
      %s762 = vtos %v761
      %v763 = vrcp.pop 2048.0
      %s764 = vtos %v763
      %s765 = smul.f32 %s762, %s764
      %s766 = sadd.f32 %s765, 1e-05
      %v767 = vstv %s766
      %v768 = vrsqrt.pop %v767
      %s769 = vtos %v768
      %v770 = vstv %s769
      %v771 = vmul.f32 %v742, %v770
      %v772 = vmul.f32 %v743, %v770
      %v773 = vmul.f32 %v744, %v770
      %v774 = vmax.f32 %v771, 0.0
      %v775 = vmax.f32 %v772, 0.0
      %v776 = vmax.f32 %v773, 0.0
      %v777 = vsel %vm719, %v774, 0.0
      %v778 = vsel %vm720, %v775, 0.0
      %v779 = vsel %vm721, %v776, 0.0
      %780 = vst [vmem:[#allocation2 + $0x8] sm:$0xff] %v777
      %781 = vst [vmem:[#allocation2 + $0x10] sm:$0xff] %v778
      %782 = vst.msk [vmem:[#allocation2 + $0x18] sm:$0xff] %vm726, %v779
      %v783 = vld [vmem:[#allocation2] sm:$0xff]
      %v784 = vld [vmem:[#allocation2 + $0x8] sm:$0xff]
      %v785 = vld [vmem:[#allocation2 + $0x10] sm:$0xff]
      %v786 = vld [vmem:[#allocation2 + $0x18] sm:$0xff]
      %v787 = vld [vmem:[%s3] sm:$0xff]
      %v788 = vld [vmem:[%s4] sm:$0xff]
      %793 = vrot.lane.b32.xlu0 %v783, 127
      %v794 = vpop.permute.xlu0 %793
      %795 = vrot.lane.b32.xlu0 %v784, 127
      %v796 = vpop.permute.xlu0 %795
      %797 = vrot.lane.b32.xlu0 %v785, 127
      %v798 = vpop.permute.xlu0 %797
      %799 = vrot.lane.b32.xlu0 %v786, 127
      %v800 = vpop.permute.xlu0 %799
      %v801 = vsel %vm366, %v794, %v796
      %v802 = vsel %vm366, %v796, %v798
      %v803 = vsel %vm366, %v798, %v800
      %804 = vrot.lane.b32.xlu0 %v783, 126
      %v805 = vpop.permute.xlu0 %804
      %806 = vrot.lane.b32.xlu0 %v784, 126
      %v807 = vpop.permute.xlu0 %806
      %808 = vrot.lane.b32.xlu0 %v785, 126
      %v809 = vpop.permute.xlu0 %808
      %810 = vrot.lane.b32.xlu0 %v786, 126
      %v811 = vpop.permute.xlu0 %810
      %v812 = vsel %vm378, %v805, %v807
      %v813 = vsel %vm378, %v807, %v809
      %v814 = vsel %vm378, %v809, %v811
      %815 = vrot.lane.b32.xlu0 %v783, 110
      %v816 = vpop.permute.xlu0 %815
      %817 = vrot.lane.b32.xlu0 %v784, 110
      %v818 = vpop.permute.xlu0 %817
      %819 = vrot.lane.b32.xlu0 %v785, 110
      %v820 = vpop.permute.xlu0 %819
      %821 = vrot.lane.b32.xlu0 %v786, 110
      %v822 = vpop.permute.xlu0 %821
      %v823 = vsel %vm390, %v816, %v818
      %v824 = vsel %vm390, %v818, %v820
      %v825 = vsel %vm390, %v820, %v822
      %826 = vrot.lane.b32.xlu0 %v784, 109
      %v827 = vpop.permute.xlu0 %826
      %828 = vrot.lane.b32.xlu0 %v785, 109
      %v829 = vpop.permute.xlu0 %828
      %830 = vrot.lane.b32.xlu0 %v786, 109
      %v831 = vpop.permute.xlu0 %830
      %v832 = vsel %vm400, %v827, %v829
      %v833 = vsel %vm400, %v829, %v831
      %834 = vrot.lane.b32.xlu0 %v784, 108
      %v835 = vpop.permute.xlu0 %834
      %836 = vrot.lane.b32.xlu0 %v785, 108
      %v837 = vpop.permute.xlu0 %836
      %838 = vrot.lane.b32.xlu0 %v786, 108
      %v839 = vpop.permute.xlu0 %838
      %v840 = vsel %vm409, %v835, %v837
      %v841 = vsel %vm409, %v837, %v839
      %842 = vrot.lane.b32.xlu0 %v784, 92
      %v843 = vpop.permute.xlu0 %842
      %844 = vrot.lane.b32.xlu0 %v785, 92
      %v845 = vpop.permute.xlu0 %844
      %846 = vrot.lane.b32.xlu0 %v786, 92
      %v847 = vpop.permute.xlu0 %846
      %v848 = vsel %vm418, %v843, %v845
      %v849 = vsel %vm418, %v845, %v847
      %850 = vrot.lane.b32.xlu0 %v784, 91
      %v851 = vpop.permute.xlu0 %850
      %852 = vrot.lane.b32.xlu0 %v785, 91
      %v853 = vpop.permute.xlu0 %852
      %854 = vrot.lane.b32.xlu0 %v786, 91
      %v855 = vpop.permute.xlu0 %854
      %v856 = vsel %vm427, %v851, %v853
      %v857 = vsel %vm427, %v853, %v855
      %858 = vrot.lane.b32.xlu0 %v784, 90
      %v859 = vpop.permute.xlu0 %858
      %860 = vrot.lane.b32.xlu0 %v785, 90
      %v861 = vpop.permute.xlu0 %860
      %862 = vrot.lane.b32.xlu0 %v786, 90
      %v863 = vpop.permute.xlu0 %862
      %v864 = vsel %vm436, %v859, %v861
      %v865 = vsel %vm436, %v861, %v863
      %867 = vset.pattern.permute.xlu0 0
      %868 = vperm.xlu0 %867, %v788
      %v869 = vpop.permute.xlu0 %868
      %871 = vrot.lane.b32.xlu0 %v783, 19
      %v872 = vpop.permute.xlu0 %871
      %873 = vrot.lane.b32.xlu0 %v784, 19
      %v874 = vpop.permute.xlu0 %873
      %875 = vrot.lane.b32.xlu0 %v785, 19
      %v876 = vpop.permute.xlu0 %875
      %877 = vrot.lane.b32.xlu0 %v786, 19
      %v878 = vpop.permute.xlu0 %877
      %879 = vrot.lane.b32.xlu0 %v801, 19
      %v880 = vpop.permute.xlu0 %879
      %881 = vrot.lane.b32.xlu0 %v802, 19
      %v882 = vpop.permute.xlu0 %881
      %883 = vrot.lane.b32.xlu0 %v803, 19
      %v884 = vpop.permute.xlu0 %883
      %885 = vrot.lane.b32.xlu0 %v800, 19
      %v886 = vpop.permute.xlu0 %885
      %887 = vrot.lane.b32.xlu0 %v812, 19
      %v888 = vpop.permute.xlu0 %887
      %889 = vrot.lane.b32.xlu0 %v813, 19
      %v890 = vpop.permute.xlu0 %889
      %891 = vrot.lane.b32.xlu0 %v814, 19
      %v892 = vpop.permute.xlu0 %891
      %893 = vrot.lane.b32.xlu0 %v811, 19
      %v894 = vpop.permute.xlu0 %893
      %895 = vrot.lane.b32.xlu0 %v823, 19
      %v896 = vpop.permute.xlu0 %895
      %897 = vrot.lane.b32.xlu0 %v824, 19
      %v898 = vpop.permute.xlu0 %897
      %899 = vrot.lane.b32.xlu0 %v825, 19
      %v900 = vpop.permute.xlu0 %899
      %901 = vrot.lane.b32.xlu0 %v822, 19
      %v902 = vpop.permute.xlu0 %901
      %903 = vrot.lane.b32.xlu0 %v827, 19
      %v904 = vpop.permute.xlu0 %903
      %905 = vrot.lane.b32.xlu0 %v832, 19
      %v906 = vpop.permute.xlu0 %905
      %907 = vrot.lane.b32.xlu0 %v833, 19
      %v908 = vpop.permute.xlu0 %907
      %909 = vrot.lane.b32.xlu0 %v831, 19
      %v910 = vpop.permute.xlu0 %909
      %911 = vrot.lane.b32.xlu0 %v835, 19
      %v912 = vpop.permute.xlu0 %911
      %913 = vrot.lane.b32.xlu0 %v840, 19
      %v914 = vpop.permute.xlu0 %913
      %915 = vrot.lane.b32.xlu0 %v841, 19
      %v916 = vpop.permute.xlu0 %915
      %917 = vrot.lane.b32.xlu0 %v839, 19
      %v918 = vpop.permute.xlu0 %917
      %919 = vrot.lane.b32.xlu0 %v843, 19
      %v920 = vpop.permute.xlu0 %919
      %921 = vrot.lane.b32.xlu0 %v848, 19
      %v922 = vpop.permute.xlu0 %921
      %923 = vrot.lane.b32.xlu0 %v849, 19
      %v924 = vpop.permute.xlu0 %923
      %925 = vrot.lane.b32.xlu0 %v847, 19
      %v926 = vpop.permute.xlu0 %925
      %927 = vrot.lane.b32.xlu0 %v851, 19
      %v928 = vpop.permute.xlu0 %927
      %929 = vrot.lane.b32.xlu0 %v856, 19
      %v930 = vpop.permute.xlu0 %929
      %931 = vrot.lane.b32.xlu0 %v857, 19
      %v932 = vpop.permute.xlu0 %931
      %933 = vrot.lane.b32.xlu0 %v855, 19
      %v934 = vpop.permute.xlu0 %933
      %935 = vrot.lane.b32.xlu0 %v859, 19
      %v936 = vpop.permute.xlu0 %935
      %937 = vrot.lane.b32.xlu0 %v864, 19
      %v938 = vpop.permute.xlu0 %937
      %939 = vrot.lane.b32.xlu0 %v865, 19
      %v940 = vpop.permute.xlu0 %939
      %941 = vrot.lane.b32.xlu0 %v863, 19
      %v942 = vpop.permute.xlu0 %941
      %v943 = vsel %vm516, %v872, %v874
      %v944 = vsel %vm516, %v874, %v876
      %v945 = vsel %vm516, %v876, %v878
      %v946 = vsel %vm516, %v880, %v882
      %v947 = vsel %vm516, %v882, %v884
      %v948 = vsel %vm516, %v884, %v886
      %v949 = vsel %vm516, %v888, %v890
      %v950 = vsel %vm516, %v890, %v892
      %v951 = vsel %vm516, %v892, %v894
      %v952 = vsel %vm516, %v896, %v898
      %v953 = vsel %vm516, %v898, %v900
      %v954 = vsel %vm516, %v900, %v902
      %v955 = vsel %vm516, %v904, %v906
      %v956 = vsel %vm516, %v906, %v908
      %v957 = vsel %vm516, %v908, %v910
      %v958 = vsel %vm516, %v912, %v914
      %v959 = vsel %vm516, %v914, %v916
      %v960 = vsel %vm516, %v916, %v918
      %v961 = vsel %vm516, %v920, %v922
      %v962 = vsel %vm516, %v922, %v924
      %v963 = vsel %vm516, %v924, %v926
      %v964 = vsel %vm516, %v928, %v930
      %v965 = vsel %vm516, %v930, %v932
      %v966 = vsel %vm516, %v932, %v934
      %v967 = vsel %vm516, %v936, %v938
      %v968 = vsel %vm516, %v938, %v940
      %v969 = vsel %vm516, %v940, %v942
      %v998 = vsel %vm571, %v787, 0
      %1000 = vmatprep.subr.mxu0 %v944
      %1001 = vmatpush1.msra.mxu0 %v943
      %1002 = vmatprep.subr.mxu0 %v947
      %1003 = vmatpush1.msra.mxu0 %v946
      %1004 = vmatprep.subr.mxu0 %v950
      %1005 = vmatpush1.msra.mxu0 %v949
      %1006 = vmatprep.subr.mxu0 %v953
      %1007 = vmatpush1.msra.mxu0 %v952
      %1008 = vmatprep.subr.mxu0 %v956
      %1009 = vmatpush1.msra.mxu0 %v955
      %1010 = vmatprep.subr.mxu0 %v959
      %1011 = vmatpush1.msra.mxu0 %v958
      %1012 = vmatprep.subr.mxu0 %v962
      %1013 = vmatpush1.msra.mxu0 %v961
      %1014 = vmatprep.subr.mxu0 %v965
      %1015 = vmatpush1.msra.mxu0 %v964
      %1016 = vmatprep.subr.mxu0 %v968
      %1017 = vmatpush1.msra.mxu0 %v967
      %1018 = vmatprep.subr.mxu0 0.0
      %1019 = vmatpush1.msra.mxu0 0.0
      %1020 = vmatprep.subr.mxu0 0.0
      %1021 = vmatpush1.msra.mxu0 0.0
      %1022 = vmatprep.subr.mxu0 0.0
      %1023 = vmatpush1.msra.mxu0 0.0
      %1024 = vmatprep.subr.mxu0 0.0
      %1025 = vmatpush1.msra.mxu0 0.0
      %1026 = vmatprep.subr.mxu0 0.0
      %1027 = vmatpush1.msra.mxu0 0.0
      %1028 = vmatprep.subr.mxu0 0.0
      %1029 = vmatpush1.msra.mxu0 0.0
      %1030 = vmatprep.subr.mxu0 0.0
      %1031 = vmatpush1.msra.mxu0 0.0
      %1032 = vmatprep.subr.mxu0 0.0
      %1033 = vmatpush1.msra.mxu0 0.0
      %1034 = vmatprep.subr.mxu0 0.0
      %1035 = vmatpush1.msra.mxu0 0.0
      %1036 = vmatprep.subr.mxu0 0.0
      %1037 = vmatpush1.msra.mxu0 0.0
      %1038 = vmatprep.subr.mxu0 0.0
      %1039 = vmatpush1.msra.mxu0 0.0
      %1040 = vmatprep.subr.mxu0 0.0
      %1041 = vmatpush1.msra.mxu0 0.0
      %1042 = vmatprep.subr.mxu0 0.0
      %1043 = vmatpush1.msra.mxu0 0.0
      %1044 = vmatprep.subr.mxu0 0.0
      %1045 = vmatpush1.msra.mxu0 0.0
      %1046 = vmatprep.subr.mxu0 0.0
      %1047 = vmatpush1.msra.mxu0 0.0
      %1048 = vmatprep.subr.mxu0 0.0
      %1049 = vmatpush1.msra.mxu0 0.0
      %1050 = vmatprep.subr.mxu0 0.0
      %1051 = vmatpush1.msra.mxu0 0.0
      %1052 = vmatprep.subr.mxu0 0.0
      %1053 = vmatpush1.msra.mxu0 0.0
      %1054 = vmatprep.subr.mxu0 0.0
      %1055 = vmatpush1.msra.mxu0 0.0
      %1056 = vmatprep.subr.mxu0 0.0
      %1057 = vmatpush1.msra.mxu0 0.0
      %1058 = vmatprep.subr.mxu0 0.0
      %1059 = vmatpush1.msra.mxu0 0.0
      %1060 = vmatprep.subr.mxu0 0.0
      %1061 = vmatpush1.msra.mxu0 0.0
      %1062 = vmatprep.subr.mxu0 0.0
      %1063 = vmatpush1.msra.mxu0 0.0
      %1064 = vmatprep.mubr.f32.mxu0 0.0
      %1065 = vmatmul.mubr.f32.gmra.mrb[0].mxu0 %v998
      %v1066 = vpop.f32.mrb[0].mxu0
      %v1067 = vadd.f32 %v869, %v1066
      %v1068 = vpop.f32.mrb[0].mxu0
      %v1069 = vadd.f32 %v869, %v1068
      %1070 = vdwg.mxu0
      %1071 = vmatprep.subr.mxu0 0.0
      %1072 = vmatpush1.msra.mxu0 %v945
      %1073 = vmatprep.subr.mxu0 0.0
      %1074 = vmatpush1.msra.mxu0 %v948
      %1075 = vmatprep.subr.mxu0 0.0
      %1076 = vmatpush1.msra.mxu0 %v951
      %1077 = vmatprep.subr.mxu0 0.0
      %1078 = vmatpush1.msra.mxu0 %v954
      %1079 = vmatprep.subr.mxu0 0.0
      %1080 = vmatpush1.msra.mxu0 %v957
      %1081 = vmatprep.subr.mxu0 0.0
      %1082 = vmatpush1.msra.mxu0 %v960
      %1083 = vmatprep.subr.mxu0 0.0
      %1084 = vmatpush1.msra.mxu0 %v963
      %1085 = vmatprep.subr.mxu0 0.0
      %1086 = vmatpush1.msra.mxu0 %v966
      %1087 = vmatprep.subr.mxu0 0.0
      %1088 = vmatpush1.msra.mxu0 %v969
      %1089 = vmatprep.subr.mxu0 0.0
      %1090 = vmatpush1.msra.mxu0 0.0
      %1091 = vmatprep.subr.mxu0 0.0
      %1092 = vmatpush1.msra.mxu0 0.0
      %1093 = vmatprep.subr.mxu0 0.0
      %1094 = vmatpush1.msra.mxu0 0.0
      %1095 = vmatprep.subr.mxu0 0.0
      %1096 = vmatpush1.msra.mxu0 0.0
      %1097 = vmatprep.subr.mxu0 0.0
      %1098 = vmatpush1.msra.mxu0 0.0
      %1099 = vmatprep.subr.mxu0 0.0
      %1100 = vmatpush1.msra.mxu0 0.0
      %1101 = vmatprep.subr.mxu0 0.0
      %1102 = vmatpush1.msra.mxu0 0.0
      %1103 = vmatprep.subr.mxu0 0.0
      %1104 = vmatpush1.msra.mxu0 0.0
      %1105 = vmatprep.subr.mxu0 0.0
      %1106 = vmatpush1.msra.mxu0 0.0
      %1107 = vmatprep.subr.mxu0 0.0
      %1108 = vmatpush1.msra.mxu0 0.0
      %1109 = vmatprep.subr.mxu0 0.0
      %1110 = vmatpush1.msra.mxu0 0.0
      %1111 = vmatprep.subr.mxu0 0.0
      %1112 = vmatpush1.msra.mxu0 0.0
      %1113 = vmatprep.subr.mxu0 0.0
      %1114 = vmatpush1.msra.mxu0 0.0
      %1115 = vmatprep.subr.mxu0 0.0
      %1116 = vmatpush1.msra.mxu0 0.0
      %1117 = vmatprep.subr.mxu0 0.0
      %1118 = vmatpush1.msra.mxu0 0.0
      %1119 = vmatprep.subr.mxu0 0.0
      %1120 = vmatpush1.msra.mxu0 0.0
      %1121 = vmatprep.subr.mxu0 0.0
      %1122 = vmatpush1.msra.mxu0 0.0
      %1123 = vmatprep.subr.mxu0 0.0
      %1124 = vmatpush1.msra.mxu0 0.0
      %1125 = vmatprep.subr.mxu0 0.0
      %1126 = vmatpush1.msra.mxu0 0.0
      %1127 = vmatprep.subr.mxu0 0.0
      %1128 = vmatpush1.msra.mxu0 0.0
      %1129 = vmatprep.subr.mxu0 0.0
      %1130 = vmatpush1.msra.mxu0 0.0
      %1131 = vmatprep.subr.mxu0 0.0
      %1132 = vmatpush1.msra.mxu0 0.0
      %1133 = vmatprep.subr.mxu0 0.0
      %1134 = vmatpush1.msra.mxu0 0.0
      %1135 = vmatprep.mubr.f32.mxu0 0.0
      %1136 = vmatmul.mubr.f32.gmra.mrb[0].mxu0 %v998
      %v1137 = vpop.f32.mrb[0].mxu0
      %v1138 = vadd.f32 %v869, %v1137
      %v1139 = vpop.f32.mrb[0].mxu0
      %1140 = vdwg.mxu0
      %v1141 = vsel %vm719, %v1067, 0.0
      %v1142 = vsel %vm720, %v1069, 0.0
      %v1143 = vsel %vm721, %v1138, 0.0
      %v1144 = vmax.f32 %v1141, 0.0
      %v1145 = vmax.f32 %v1142, 0.0
      %v1146 = vmax.f32 %v1143, 0.0
      %1147 = vst [vmem:[#allocation3 + $0x8] sm:$0xff] %v1144
      %1148 = vst [vmem:[#allocation3 + $0x10] sm:$0xff] %v1145
      %1149 = vst.msk [vmem:[#allocation3 + $0x18] sm:$0xff] %vm726, %v1146
      %v1150 = vld [vmem:[#allocation3] sm:$0xff]
      %v1151 = vld [vmem:[#allocation3 + $0x8] sm:$0xff]
      %v1152 = vld [vmem:[#allocation3 + $0x10] sm:$0xff]
      %v1153 = vld [vmem:[#allocation3 + $0x18] sm:$0xff]
      %s1154 = scalar_lea.vmem %s3, 8
      %v1155 = vld [vmem:[%s1154] sm:$0xff]
      %s1156 = scalar_lea.vmem %s4, 8
      %v1157 = vld [vmem:[%s1156] sm:$0xff]
      %1162 = vrot.lane.b32.xlu0 %v1150, 127
      %v1163 = vpop.permute.xlu0 %1162
      %1164 = vrot.lane.b32.xlu0 %v1151, 127
      %v1165 = vpop.permute.xlu0 %1164
      %1166 = vrot.lane.b32.xlu0 %v1152, 127
      %v1167 = vpop.permute.xlu0 %1166
      %1168 = vrot.lane.b32.xlu0 %v1153, 127
      %v1169 = vpop.permute.xlu0 %1168
      %v1170 = vsel %vm366, %v1163, %v1165
      %v1171 = vsel %vm366, %v1165, %v1167
      %v1172 = vsel %vm366, %v1167, %v1169
      %1173 = vrot.lane.b32.xlu0 %v1150, 126
      %v1174 = vpop.permute.xlu0 %1173
      %1175 = vrot.lane.b32.xlu0 %v1151, 126
      %v1176 = vpop.permute.xlu0 %1175
      %1177 = vrot.lane.b32.xlu0 %v1152, 126
      %v1178 = vpop.permute.xlu0 %1177
      %1179 = vrot.lane.b32.xlu0 %v1153, 126
      %v1180 = vpop.permute.xlu0 %1179
      %v1181 = vsel %vm378, %v1174, %v1176
      %v1182 = vsel %vm378, %v1176, %v1178
      %v1183 = vsel %vm378, %v1178, %v1180
      %1184 = vrot.lane.b32.xlu0 %v1150, 110
      %v1185 = vpop.permute.xlu0 %1184
      %1186 = vrot.lane.b32.xlu0 %v1151, 110
      %v1187 = vpop.permute.xlu0 %1186
      %1188 = vrot.lane.b32.xlu0 %v1152, 110
      %v1189 = vpop.permute.xlu0 %1188
      %1190 = vrot.lane.b32.xlu0 %v1153, 110
      %v1191 = vpop.permute.xlu0 %1190
      %v1192 = vsel %vm390, %v1185, %v1187
      %v1193 = vsel %vm390, %v1187, %v1189
      %v1194 = vsel %vm390, %v1189, %v1191
      %1195 = vrot.lane.b32.xlu0 %v1151, 109
      %v1196 = vpop.permute.xlu0 %1195
      %1197 = vrot.lane.b32.xlu0 %v1152, 109
      %v1198 = vpop.permute.xlu0 %1197
      %1199 = vrot.lane.b32.xlu0 %v1153, 109
      %v1200 = vpop.permute.xlu0 %1199
      %v1201 = vsel %vm400, %v1196, %v1198
      %v1202 = vsel %vm400, %v1198, %v1200
      %1203 = vrot.lane.b32.xlu0 %v1151, 108
      %v1204 = vpop.permute.xlu0 %1203
      %1205 = vrot.lane.b32.xlu0 %v1152, 108
      %v1206 = vpop.permute.xlu0 %1205
      %1207 = vrot.lane.b32.xlu0 %v1153, 108
      %v1208 = vpop.permute.xlu0 %1207
      %v1209 = vsel %vm409, %v1204, %v1206
      %v1210 = vsel %vm409, %v1206, %v1208
      %1211 = vrot.lane.b32.xlu0 %v1151, 92
      %v1212 = vpop.permute.xlu0 %1211
      %1213 = vrot.lane.b32.xlu0 %v1152, 92
      %v1214 = vpop.permute.xlu0 %1213
      %1215 = vrot.lane.b32.xlu0 %v1153, 92
      %v1216 = vpop.permute.xlu0 %1215
      %v1217 = vsel %vm418, %v1212, %v1214
      %v1218 = vsel %vm418, %v1214, %v1216
      %1219 = vrot.lane.b32.xlu0 %v1151, 91
      %v1220 = vpop.permute.xlu0 %1219
      %1221 = vrot.lane.b32.xlu0 %v1152, 91
      %v1222 = vpop.permute.xlu0 %1221
      %1223 = vrot.lane.b32.xlu0 %v1153, 91
      %v1224 = vpop.permute.xlu0 %1223
      %v1225 = vsel %vm427, %v1220, %v1222
      %v1226 = vsel %vm427, %v1222, %v1224
      %1227 = vrot.lane.b32.xlu0 %v1151, 90
      %v1228 = vpop.permute.xlu0 %1227
      %1229 = vrot.lane.b32.xlu0 %v1152, 90
      %v1230 = vpop.permute.xlu0 %1229
      %1231 = vrot.lane.b32.xlu0 %v1153, 90
      %v1232 = vpop.permute.xlu0 %1231
      %v1233 = vsel %vm436, %v1228, %v1230
      %v1234 = vsel %vm436, %v1230, %v1232
      %1236 = vset.pattern.permute.xlu0 0
      %1237 = vperm.xlu0 %1236, %v1157
      %v1238 = vpop.permute.xlu0 %1237
      %1240 = vrot.lane.b32.xlu0 %v1150, 19
      %v1241 = vpop.permute.xlu0 %1240
      %1242 = vrot.lane.b32.xlu0 %v1151, 19
      %v1243 = vpop.permute.xlu0 %1242
      %1244 = vrot.lane.b32.xlu0 %v1152, 19
      %v1245 = vpop.permute.xlu0 %1244
      %1246 = vrot.lane.b32.xlu0 %v1153, 19
      %v1247 = vpop.permute.xlu0 %1246
      %1248 = vrot.lane.b32.xlu0 %v1170, 19
      %v1249 = vpop.permute.xlu0 %1248
      %1250 = vrot.lane.b32.xlu0 %v1171, 19
      %v1251 = vpop.permute.xlu0 %1250
      %1252 = vrot.lane.b32.xlu0 %v1172, 19
      %v1253 = vpop.permute.xlu0 %1252
      %1254 = vrot.lane.b32.xlu0 %v1169, 19
      %v1255 = vpop.permute.xlu0 %1254
      %1256 = vrot.lane.b32.xlu0 %v1181, 19
      %v1257 = vpop.permute.xlu0 %1256
      %1258 = vrot.lane.b32.xlu0 %v1182, 19
      %v1259 = vpop.permute.xlu0 %1258
      %1260 = vrot.lane.b32.xlu0 %v1183, 19
      %v1261 = vpop.permute.xlu0 %1260
      %1262 = vrot.lane.b32.xlu0 %v1180, 19
      %v1263 = vpop.permute.xlu0 %1262
      %1264 = vrot.lane.b32.xlu0 %v1192, 19
      %v1265 = vpop.permute.xlu0 %1264
      %1266 = vrot.lane.b32.xlu0 %v1193, 19
      %v1267 = vpop.permute.xlu0 %1266
      %1268 = vrot.lane.b32.xlu0 %v1194, 19
      %v1269 = vpop.permute.xlu0 %1268
      %1270 = vrot.lane.b32.xlu0 %v1191, 19
      %v1271 = vpop.permute.xlu0 %1270
      %1272 = vrot.lane.b32.xlu0 %v1196, 19
      %v1273 = vpop.permute.xlu0 %1272
      %1274 = vrot.lane.b32.xlu0 %v1201, 19
      %v1275 = vpop.permute.xlu0 %1274
      %1276 = vrot.lane.b32.xlu0 %v1202, 19
      %v1277 = vpop.permute.xlu0 %1276
      %1278 = vrot.lane.b32.xlu0 %v1200, 19
      %v1279 = vpop.permute.xlu0 %1278
      %1280 = vrot.lane.b32.xlu0 %v1204, 19
      %v1281 = vpop.permute.xlu0 %1280
      %1282 = vrot.lane.b32.xlu0 %v1209, 19
      %v1283 = vpop.permute.xlu0 %1282
      %1284 = vrot.lane.b32.xlu0 %v1210, 19
      %v1285 = vpop.permute.xlu0 %1284
      %1286 = vrot.lane.b32.xlu0 %v1208, 19
      %v1287 = vpop.permute.xlu0 %1286
      %1288 = vrot.lane.b32.xlu0 %v1212, 19
      %v1289 = vpop.permute.xlu0 %1288
      %1290 = vrot.lane.b32.xlu0 %v1217, 19
      %v1291 = vpop.permute.xlu0 %1290
      %1292 = vrot.lane.b32.xlu0 %v1218, 19
      %v1293 = vpop.permute.xlu0 %1292
      %1294 = vrot.lane.b32.xlu0 %v1216, 19
      %v1295 = vpop.permute.xlu0 %1294
      %1296 = vrot.lane.b32.xlu0 %v1220, 19
      %v1297 = vpop.permute.xlu0 %1296
      %1298 = vrot.lane.b32.xlu0 %v1225, 19
      %v1299 = vpop.permute.xlu0 %1298
      %1300 = vrot.lane.b32.xlu0 %v1226, 19
      %v1301 = vpop.permute.xlu0 %1300
      %1302 = vrot.lane.b32.xlu0 %v1224, 19
      %v1303 = vpop.permute.xlu0 %1302
      %1304 = vrot.lane.b32.xlu0 %v1228, 19
      %v1305 = vpop.permute.xlu0 %1304
      %1306 = vrot.lane.b32.xlu0 %v1233, 19
      %v1307 = vpop.permute.xlu0 %1306
      %1308 = vrot.lane.b32.xlu0 %v1234, 19
      %v1309 = vpop.permute.xlu0 %1308
      %1310 = vrot.lane.b32.xlu0 %v1232, 19
      %v1311 = vpop.permute.xlu0 %1310
      %v1312 = vsel %vm516, %v1241, %v1243
      %v1313 = vsel %vm516, %v1243, %v1245
      %v1314 = vsel %vm516, %v1245, %v1247
      %v1315 = vsel %vm516, %v1249, %v1251
      %v1316 = vsel %vm516, %v1251, %v1253
      %v1317 = vsel %vm516, %v1253, %v1255
      %v1318 = vsel %vm516, %v1257, %v1259
      %v1319 = vsel %vm516, %v1259, %v1261
      %v1320 = vsel %vm516, %v1261, %v1263
      %v1321 = vsel %vm516, %v1265, %v1267
      %v1322 = vsel %vm516, %v1267, %v1269
      %v1323 = vsel %vm516, %v1269, %v1271
      %v1324 = vsel %vm516, %v1273, %v1275
      %v1325 = vsel %vm516, %v1275, %v1277
      %v1326 = vsel %vm516, %v1277, %v1279
      %v1327 = vsel %vm516, %v1281, %v1283
      %v1328 = vsel %vm516, %v1283, %v1285
      %v1329 = vsel %vm516, %v1285, %v1287
      %v1330 = vsel %vm516, %v1289, %v1291
      %v1331 = vsel %vm516, %v1291, %v1293
      %v1332 = vsel %vm516, %v1293, %v1295
      %v1333 = vsel %vm516, %v1297, %v1299
      %v1334 = vsel %vm516, %v1299, %v1301
      %v1335 = vsel %vm516, %v1301, %v1303
      %v1336 = vsel %vm516, %v1305, %v1307
      %v1337 = vsel %vm516, %v1307, %v1309
      %v1338 = vsel %vm516, %v1309, %v1311
      %v1367 = vsel %vm571, %v1155, 0
      %1369 = vmatprep.subr.mxu0 %v1313
      %1370 = vmatpush1.msra.mxu0 %v1312
      %1371 = vmatprep.subr.mxu0 %v1316
      %1372 = vmatpush1.msra.mxu0 %v1315
      %1373 = vmatprep.subr.mxu0 %v1319
      %1374 = vmatpush1.msra.mxu0 %v1318
      %1375 = vmatprep.subr.mxu0 %v1322
      %1376 = vmatpush1.msra.mxu0 %v1321
      %1377 = vmatprep.subr.mxu0 %v1325
      %1378 = vmatpush1.msra.mxu0 %v1324
      %1379 = vmatprep.subr.mxu0 %v1328
      %1380 = vmatpush1.msra.mxu0 %v1327
      %1381 = vmatprep.subr.mxu0 %v1331
      %1382 = vmatpush1.msra.mxu0 %v1330
      %1383 = vmatprep.subr.mxu0 %v1334
      %1384 = vmatpush1.msra.mxu0 %v1333
      %1385 = vmatprep.subr.mxu0 %v1337
      %1386 = vmatpush1.msra.mxu0 %v1336
      %1387 = vmatprep.subr.mxu0 0.0
      %1388 = vmatpush1.msra.mxu0 0.0
      %1389 = vmatprep.subr.mxu0 0.0
      %1390 = vmatpush1.msra.mxu0 0.0
      %1391 = vmatprep.subr.mxu0 0.0
      %1392 = vmatpush1.msra.mxu0 0.0
      %1393 = vmatprep.subr.mxu0 0.0
      %1394 = vmatpush1.msra.mxu0 0.0
      %1395 = vmatprep.subr.mxu0 0.0
      %1396 = vmatpush1.msra.mxu0 0.0
      %1397 = vmatprep.subr.mxu0 0.0
      %1398 = vmatpush1.msra.mxu0 0.0
      %1399 = vmatprep.subr.mxu0 0.0
      %1400 = vmatpush1.msra.mxu0 0.0
      %1401 = vmatprep.subr.mxu0 0.0
      %1402 = vmatpush1.msra.mxu0 0.0
      %1403 = vmatprep.subr.mxu0 0.0
      %1404 = vmatpush1.msra.mxu0 0.0
      %1405 = vmatprep.subr.mxu0 0.0
      %1406 = vmatpush1.msra.mxu0 0.0
      %1407 = vmatprep.subr.mxu0 0.0
      %1408 = vmatpush1.msra.mxu0 0.0
      %1409 = vmatprep.subr.mxu0 0.0
      %1410 = vmatpush1.msra.mxu0 0.0
      %1411 = vmatprep.subr.mxu0 0.0
      %1412 = vmatpush1.msra.mxu0 0.0
      %1413 = vmatprep.subr.mxu0 0.0
      %1414 = vmatpush1.msra.mxu0 0.0
      %1415 = vmatprep.subr.mxu0 0.0
      %1416 = vmatpush1.msra.mxu0 0.0
      %1417 = vmatprep.subr.mxu0 0.0
      %1418 = vmatpush1.msra.mxu0 0.0
      %1419 = vmatprep.subr.mxu0 0.0
      %1420 = vmatpush1.msra.mxu0 0.0
      %1421 = vmatprep.subr.mxu0 0.0
      %1422 = vmatpush1.msra.mxu0 0.0
      %1423 = vmatprep.subr.mxu0 0.0
      %1424 = vmatpush1.msra.mxu0 0.0
      %1425 = vmatprep.subr.mxu0 0.0
      %1426 = vmatpush1.msra.mxu0 0.0
      %1427 = vmatprep.subr.mxu0 0.0
      %1428 = vmatpush1.msra.mxu0 0.0
      %1429 = vmatprep.subr.mxu0 0.0
      %1430 = vmatpush1.msra.mxu0 0.0
      %1431 = vmatprep.subr.mxu0 0.0
      %1432 = vmatpush1.msra.mxu0 0.0
      %1433 = vmatprep.mubr.f32.mxu0 0.0
      %1434 = vmatmul.mubr.f32.gmra.mrb[0].mxu0 %v1367
      %v1435 = vpop.f32.mrb[0].mxu0
      %v1436 = vadd.f32 %v1238, %v1435
      %v1437 = vpop.f32.mrb[0].mxu0
      %v1438 = vadd.f32 %v1238, %v1437
      %1439 = vdwg.mxu0
      %1440 = vmatprep.subr.mxu0 0.0
      %1441 = vmatpush1.msra.mxu0 %v1314
      %1442 = vmatprep.subr.mxu0 0.0
      %1443 = vmatpush1.msra.mxu0 %v1317
      %1444 = vmatprep.subr.mxu0 0.0
      %1445 = vmatpush1.msra.mxu0 %v1320
      %1446 = vmatprep.subr.mxu0 0.0
      %1447 = vmatpush1.msra.mxu0 %v1323
      %1448 = vmatprep.subr.mxu0 0.0
      %1449 = vmatpush1.msra.mxu0 %v1326
      %1450 = vmatprep.subr.mxu0 0.0
      %1451 = vmatpush1.msra.mxu0 %v1329
      %1452 = vmatprep.subr.mxu0 0.0
      %1453 = vmatpush1.msra.mxu0 %v1332
      %1454 = vmatprep.subr.mxu0 0.0
      %1455 = vmatpush1.msra.mxu0 %v1335
      %1456 = vmatprep.subr.mxu0 0.0
      %1457 = vmatpush1.msra.mxu0 %v1338
      %1458 = vmatprep.subr.mxu0 0.0
      %1459 = vmatpush1.msra.mxu0 0.0
      %1460 = vmatprep.subr.mxu0 0.0
      %1461 = vmatpush1.msra.mxu0 0.0
      %1462 = vmatprep.subr.mxu0 0.0
      %1463 = vmatpush1.msra.mxu0 0.0
      %1464 = vmatprep.subr.mxu0 0.0
      %1465 = vmatpush1.msra.mxu0 0.0
      %1466 = vmatprep.subr.mxu0 0.0
      %1467 = vmatpush1.msra.mxu0 0.0
      %1468 = vmatprep.subr.mxu0 0.0
      %1469 = vmatpush1.msra.mxu0 0.0
      %1470 = vmatprep.subr.mxu0 0.0
      %1471 = vmatpush1.msra.mxu0 0.0
      %1472 = vmatprep.subr.mxu0 0.0
      %1473 = vmatpush1.msra.mxu0 0.0
      %1474 = vmatprep.subr.mxu0 0.0
      %1475 = vmatpush1.msra.mxu0 0.0
      %1476 = vmatprep.subr.mxu0 0.0
      %1477 = vmatpush1.msra.mxu0 0.0
      %1478 = vmatprep.subr.mxu0 0.0
      %1479 = vmatpush1.msra.mxu0 0.0
      %1480 = vmatprep.subr.mxu0 0.0
      %1481 = vmatpush1.msra.mxu0 0.0
      %1482 = vmatprep.subr.mxu0 0.0
      %1483 = vmatpush1.msra.mxu0 0.0
      %1484 = vmatprep.subr.mxu0 0.0
      %1485 = vmatpush1.msra.mxu0 0.0
      %1486 = vmatprep.subr.mxu0 0.0
      %1487 = vmatpush1.msra.mxu0 0.0
      %1488 = vmatprep.subr.mxu0 0.0
      %1489 = vmatpush1.msra.mxu0 0.0
      %1490 = vmatprep.subr.mxu0 0.0
      %1491 = vmatpush1.msra.mxu0 0.0
      %1492 = vmatprep.subr.mxu0 0.0
      %1493 = vmatpush1.msra.mxu0 0.0
      %1494 = vmatprep.subr.mxu0 0.0
      %1495 = vmatpush1.msra.mxu0 0.0
      %1496 = vmatprep.subr.mxu0 0.0
      %1497 = vmatpush1.msra.mxu0 0.0
      %1498 = vmatprep.subr.mxu0 0.0
      %1499 = vmatpush1.msra.mxu0 0.0
      %1500 = vmatprep.subr.mxu0 0.0
      %1501 = vmatpush1.msra.mxu0 0.0
      %1502 = vmatprep.subr.mxu0 0.0
      %1503 = vmatpush1.msra.mxu0 0.0
      %1504 = vmatprep.mubr.f32.mxu0 0.0
      %1505 = vmatmul.mubr.f32.gmra.mrb[0].mxu0 %v1367
      %v1506 = vpop.f32.mrb[0].mxu0
      %v1507 = vadd.f32 %v1238, %v1506
      %v1508 = vpop.f32.mrb[0].mxu0
      %1509 = vdwg.mxu0
      %v1510 = vsel %vm719, %v1436, 0.0
      %v1511 = vsel %vm720, %v1438, 0.0
      %v1512 = vsel %vm721, %v1507, 0.0
      %v1513 = vadd.f32 %v1510, %v784
      %v1514 = vadd.f32 %v1511, %v785
      %v1515 = vadd.f32 %v1512, %v786
      %v1516 = vmax.f32 %v1513, 0.0
      %v1517 = vmax.f32 %v1514, 0.0
      %v1518 = vmax.f32 %v1515, 0.0
      %1519 = vst [vmem:[#allocation2 + $0x8] sm:$0xff] %v1516
      %1520 = vst [vmem:[#allocation2 + $0x10] sm:$0xff] %v1517
      %1521 = vst.msk [vmem:[#allocation2 + $0x18] sm:$0xff] %vm726, %v1518
      %v1522 = vld [vmem:[#allocation2] sm:$0xff]
      %v1523 = vld [vmem:[#allocation2 + $0x8] sm:$0xff]
      %v1524 = vld [vmem:[#allocation2 + $0x10] sm:$0xff]
      %v1525 = vld [vmem:[#allocation2 + $0x18] sm:$0xff]
      %s1526 = scalar_lea.vmem %s3, 16
      %v1527 = vld [vmem:[%s1526] sm:$0xff]
      %s1528 = scalar_lea.vmem %s4, 16
      %v1529 = vld [vmem:[%s1528] sm:$0xff]
      %1534 = vrot.lane.b32.xlu0 %v1522, 127
      %v1535 = vpop.permute.xlu0 %1534
      %1536 = vrot.lane.b32.xlu0 %v1523, 127
      %v1537 = vpop.permute.xlu0 %1536
      %1538 = vrot.lane.b32.xlu0 %v1524, 127
      %v1539 = vpop.permute.xlu0 %1538
      %1540 = vrot.lane.b32.xlu0 %v1525, 127
      %v1541 = vpop.permute.xlu0 %1540
      %v1542 = vsel %vm366, %v1535, %v1537
      %v1543 = vsel %vm366, %v1537, %v1539
      %v1544 = vsel %vm366, %v1539, %v1541
      %1545 = vrot.lane.b32.xlu0 %v1522, 126
      %v1546 = vpop.permute.xlu0 %1545
      %1547 = vrot.lane.b32.xlu0 %v1523, 126
      %v1548 = vpop.permute.xlu0 %1547
      %1549 = vrot.lane.b32.xlu0 %v1524, 126
      %v1550 = vpop.permute.xlu0 %1549
      %1551 = vrot.lane.b32.xlu0 %v1525, 126
      %v1552 = vpop.permute.xlu0 %1551
      %v1553 = vsel %vm378, %v1546, %v1548
      %v1554 = vsel %vm378, %v1548, %v1550
      %v1555 = vsel %vm378, %v1550, %v1552
      %1556 = vrot.lane.b32.xlu0 %v1522, 110
      %v1557 = vpop.permute.xlu0 %1556
      %1558 = vrot.lane.b32.xlu0 %v1523, 110
      %v1559 = vpop.permute.xlu0 %1558
      %1560 = vrot.lane.b32.xlu0 %v1524, 110
      %v1561 = vpop.permute.xlu0 %1560
      %1562 = vrot.lane.b32.xlu0 %v1525, 110
      %v1563 = vpop.permute.xlu0 %1562
      %v1564 = vsel %vm390, %v1557, %v1559
      %v1565 = vsel %vm390, %v1559, %v1561
      %v1566 = vsel %vm390, %v1561, %v1563
      %1567 = vrot.lane.b32.xlu0 %v1523, 109
      %v1568 = vpop.permute.xlu0 %1567
      %1569 = vrot.lane.b32.xlu0 %v1524, 109
      %v1570 = vpop.permute.xlu0 %1569
      %1571 = vrot.lane.b32.xlu0 %v1525, 109
      %v1572 = vpop.permute.xlu0 %1571
      %v1573 = vsel %vm400, %v1568, %v1570
      %v1574 = vsel %vm400, %v1570, %v1572
      %1575 = vrot.lane.b32.xlu0 %v1523, 108
      %v1576 = vpop.permute.xlu0 %1575
      %1577 = vrot.lane.b32.xlu0 %v1524, 108
      %v1578 = vpop.permute.xlu0 %1577
      %1579 = vrot.lane.b32.xlu0 %v1525, 108
      %v1580 = vpop.permute.xlu0 %1579
      %v1581 = vsel %vm409, %v1576, %v1578
      %v1582 = vsel %vm409, %v1578, %v1580
      %1583 = vrot.lane.b32.xlu0 %v1523, 92
      %v1584 = vpop.permute.xlu0 %1583
      %1585 = vrot.lane.b32.xlu0 %v1524, 92
      %v1586 = vpop.permute.xlu0 %1585
      %1587 = vrot.lane.b32.xlu0 %v1525, 92
      %v1588 = vpop.permute.xlu0 %1587
      %v1589 = vsel %vm418, %v1584, %v1586
      %v1590 = vsel %vm418, %v1586, %v1588
      %1591 = vrot.lane.b32.xlu0 %v1523, 91
      %v1592 = vpop.permute.xlu0 %1591
      %1593 = vrot.lane.b32.xlu0 %v1524, 91
      %v1594 = vpop.permute.xlu0 %1593
      %1595 = vrot.lane.b32.xlu0 %v1525, 91
      %v1596 = vpop.permute.xlu0 %1595
      %v1597 = vsel %vm427, %v1592, %v1594
      %v1598 = vsel %vm427, %v1594, %v1596
      %1599 = vrot.lane.b32.xlu0 %v1523, 90
      %v1600 = vpop.permute.xlu0 %1599
      %1601 = vrot.lane.b32.xlu0 %v1524, 90
      %v1602 = vpop.permute.xlu0 %1601
      %1603 = vrot.lane.b32.xlu0 %v1525, 90
      %v1604 = vpop.permute.xlu0 %1603
      %v1605 = vsel %vm436, %v1600, %v1602
      %v1606 = vsel %vm436, %v1602, %v1604
      %1608 = vset.pattern.permute.xlu0 0
      %1609 = vperm.xlu0 %1608, %v1529
      %v1610 = vpop.permute.xlu0 %1609
      %1612 = vrot.lane.b32.xlu0 %v1522, 19
      %v1613 = vpop.permute.xlu0 %1612
      %1614 = vrot.lane.b32.xlu0 %v1523, 19
      %v1615 = vpop.permute.xlu0 %1614
      %1616 = vrot.lane.b32.xlu0 %v1524, 19
      %v1617 = vpop.permute.xlu0 %1616
      %1618 = vrot.lane.b32.xlu0 %v1525, 19
      %v1619 = vpop.permute.xlu0 %1618
      %1620 = vrot.lane.b32.xlu0 %v1542, 19
      %v1621 = vpop.permute.xlu0 %1620
      %1622 = vrot.lane.b32.xlu0 %v1543, 19
      %v1623 = vpop.permute.xlu0 %1622
      %1624 = vrot.lane.b32.xlu0 %v1544, 19
      %v1625 = vpop.permute.xlu0 %1624
      %1626 = vrot.lane.b32.xlu0 %v1541, 19
      %v1627 = vpop.permute.xlu0 %1626
      %1628 = vrot.lane.b32.xlu0 %v1553, 19
      %v1629 = vpop.permute.xlu0 %1628
      %1630 = vrot.lane.b32.xlu0 %v1554, 19
      %v1631 = vpop.permute.xlu0 %1630
      %1632 = vrot.lane.b32.xlu0 %v1555, 19
      %v1633 = vpop.permute.xlu0 %1632
      %1634 = vrot.lane.b32.xlu0 %v1552, 19
      %v1635 = vpop.permute.xlu0 %1634
      %1636 = vrot.lane.b32.xlu0 %v1564, 19
      %v1637 = vpop.permute.xlu0 %1636
      %1638 = vrot.lane.b32.xlu0 %v1565, 19
      %v1639 = vpop.permute.xlu0 %1638
      %1640 = vrot.lane.b32.xlu0 %v1566, 19
      %v1641 = vpop.permute.xlu0 %1640
      %1642 = vrot.lane.b32.xlu0 %v1563, 19
      %v1643 = vpop.permute.xlu0 %1642
      %1644 = vrot.lane.b32.xlu0 %v1568, 19
      %v1645 = vpop.permute.xlu0 %1644
      %1646 = vrot.lane.b32.xlu0 %v1573, 19
      %v1647 = vpop.permute.xlu0 %1646
      %1648 = vrot.lane.b32.xlu0 %v1574, 19
      %v1649 = vpop.permute.xlu0 %1648
      %1650 = vrot.lane.b32.xlu0 %v1572, 19
      %v1651 = vpop.permute.xlu0 %1650
      %1652 = vrot.lane.b32.xlu0 %v1576, 19
      %v1653 = vpop.permute.xlu0 %1652
      %1654 = vrot.lane.b32.xlu0 %v1581, 19
      %v1655 = vpop.permute.xlu0 %1654
      %1656 = vrot.lane.b32.xlu0 %v1582, 19
      %v1657 = vpop.permute.xlu0 %1656
      %1658 = vrot.lane.b32.xlu0 %v1580, 19
      %v1659 = vpop.permute.xlu0 %1658
      %1660 = vrot.lane.b32.xlu0 %v1584, 19
      %v1661 = vpop.permute.xlu0 %1660
      %1662 = vrot.lane.b32.xlu0 %v1589, 19
      %v1663 = vpop.permute.xlu0 %1662
      %1664 = vrot.lane.b32.xlu0 %v1590, 19
      %v1665 = vpop.permute.xlu0 %1664
      %1666 = vrot.lane.b32.xlu0 %v1588, 19
      %v1667 = vpop.permute.xlu0 %1666
      %1668 = vrot.lane.b32.xlu0 %v1592, 19
      %v1669 = vpop.permute.xlu0 %1668
      %1670 = vrot.lane.b32.xlu0 %v1597, 19
      %v1671 = vpop.permute.xlu0 %1670
      %1672 = vrot.lane.b32.xlu0 %v1598, 19
      %v1673 = vpop.permute.xlu0 %1672
      %1674 = vrot.lane.b32.xlu0 %v1596, 19
      %v1675 = vpop.permute.xlu0 %1674
      %1676 = vrot.lane.b32.xlu0 %v1600, 19
      %v1677 = vpop.permute.xlu0 %1676
      %1678 = vrot.lane.b32.xlu0 %v1605, 19
      %v1679 = vpop.permute.xlu0 %1678
      %1680 = vrot.lane.b32.xlu0 %v1606, 19
      %v1681 = vpop.permute.xlu0 %1680
      %1682 = vrot.lane.b32.xlu0 %v1604, 19
      %v1683 = vpop.permute.xlu0 %1682
      %v1684 = vsel %vm516, %v1613, %v1615
      %v1685 = vsel %vm516, %v1615, %v1617
      %v1686 = vsel %vm516, %v1617, %v1619
      %v1687 = vsel %vm516, %v1621, %v1623
      %v1688 = vsel %vm516, %v1623, %v1625
      %v1689 = vsel %vm516, %v1625, %v1627
      %v1690 = vsel %vm516, %v1629, %v1631
      %v1691 = vsel %vm516, %v1631, %v1633
      %v1692 = vsel %vm516, %v1633, %v1635
      %v1693 = vsel %vm516, %v1637, %v1639
      %v1694 = vsel %vm516, %v1639, %v1641
      %v1695 = vsel %vm516, %v1641, %v1643
      %v1696 = vsel %vm516, %v1645, %v1647
      %v1697 = vsel %vm516, %v1647, %v1649
      %v1698 = vsel %vm516, %v1649, %v1651
      %v1699 = vsel %vm516, %v1653, %v1655
      %v1700 = vsel %vm516, %v1655, %v1657
      %v1701 = vsel %vm516, %v1657, %v1659
      %v1702 = vsel %vm516, %v1661, %v1663
      %v1703 = vsel %vm516, %v1663, %v1665
      %v1704 = vsel %vm516, %v1665, %v1667
      %v1705 = vsel %vm516, %v1669, %v1671
      %v1706 = vsel %vm516, %v1671, %v1673
      %v1707 = vsel %vm516, %v1673, %v1675
      %v1708 = vsel %vm516, %v1677, %v1679
      %v1709 = vsel %vm516, %v1679, %v1681
      %v1710 = vsel %vm516, %v1681, %v1683
      %v1739 = vsel %vm571, %v1527, 0
      %1741 = vmatprep.subr.mxu0 %v1685
      %1742 = vmatpush1.msra.mxu0 %v1684
      %1743 = vmatprep.subr.mxu0 %v1688
      %1744 = vmatpush1.msra.mxu0 %v1687
      %1745 = vmatprep.subr.mxu0 %v1691
      %1746 = vmatpush1.msra.mxu0 %v1690
      %1747 = vmatprep.subr.mxu0 %v1694
      %1748 = vmatpush1.msra.mxu0 %v1693
      %1749 = vmatprep.subr.mxu0 %v1697
      %1750 = vmatpush1.msra.mxu0 %v1696
      %1751 = vmatprep.subr.mxu0 %v1700
      %1752 = vmatpush1.msra.mxu0 %v1699
      %1753 = vmatprep.subr.mxu0 %v1703
      %1754 = vmatpush1.msra.mxu0 %v1702
      %1755 = vmatprep.subr.mxu0 %v1706
      %1756 = vmatpush1.msra.mxu0 %v1705
      %1757 = vmatprep.subr.mxu0 %v1709
      %1758 = vmatpush1.msra.mxu0 %v1708
      %1759 = vmatprep.subr.mxu0 0.0
      %1760 = vmatpush1.msra.mxu0 0.0
      %1761 = vmatprep.subr.mxu0 0.0
      %1762 = vmatpush1.msra.mxu0 0.0
      %1763 = vmatprep.subr.mxu0 0.0
      %1764 = vmatpush1.msra.mxu0 0.0
      %1765 = vmatprep.subr.mxu0 0.0
      %1766 = vmatpush1.msra.mxu0 0.0
      %1767 = vmatprep.subr.mxu0 0.0
      %1768 = vmatpush1.msra.mxu0 0.0
      %1769 = vmatprep.subr.mxu0 0.0
      %1770 = vmatpush1.msra.mxu0 0.0
      %1771 = vmatprep.subr.mxu0 0.0
      %1772 = vmatpush1.msra.mxu0 0.0
      %1773 = vmatprep.subr.mxu0 0.0
      %1774 = vmatpush1.msra.mxu0 0.0
      %1775 = vmatprep.subr.mxu0 0.0
      %1776 = vmatpush1.msra.mxu0 0.0
      %1777 = vmatprep.subr.mxu0 0.0
      %1778 = vmatpush1.msra.mxu0 0.0
      %1779 = vmatprep.subr.mxu0 0.0
      %1780 = vmatpush1.msra.mxu0 0.0
      %1781 = vmatprep.subr.mxu0 0.0
      %1782 = vmatpush1.msra.mxu0 0.0
      %1783 = vmatprep.subr.mxu0 0.0
      %1784 = vmatpush1.msra.mxu0 0.0
      %1785 = vmatprep.subr.mxu0 0.0
      %1786 = vmatpush1.msra.mxu0 0.0
      %1787 = vmatprep.subr.mxu0 0.0
      %1788 = vmatpush1.msra.mxu0 0.0
      %1789 = vmatprep.subr.mxu0 0.0
      %1790 = vmatpush1.msra.mxu0 0.0
      %1791 = vmatprep.subr.mxu0 0.0
      %1792 = vmatpush1.msra.mxu0 0.0
      %1793 = vmatprep.subr.mxu0 0.0
      %1794 = vmatpush1.msra.mxu0 0.0
      %1795 = vmatprep.subr.mxu0 0.0
      %1796 = vmatpush1.msra.mxu0 0.0
      %1797 = vmatprep.subr.mxu0 0.0
      %1798 = vmatpush1.msra.mxu0 0.0
      %1799 = vmatprep.subr.mxu0 0.0
      %1800 = vmatpush1.msra.mxu0 0.0
      %1801 = vmatprep.subr.mxu0 0.0
      %1802 = vmatpush1.msra.mxu0 0.0
      %1803 = vmatprep.subr.mxu0 0.0
      %1804 = vmatpush1.msra.mxu0 0.0
      %1805 = vmatprep.mubr.f32.mxu0 0.0
      %1806 = vmatmul.mubr.f32.gmra.mrb[0].mxu0 %v1739
      %v1807 = vpop.f32.mrb[0].mxu0
      %v1808 = vadd.f32 %v1610, %v1807
      %v1809 = vpop.f32.mrb[0].mxu0
      %v1810 = vadd.f32 %v1610, %v1809
      %1811 = vdwg.mxu0
      %1812 = vmatprep.subr.mxu0 0.0
      %1813 = vmatpush1.msra.mxu0 %v1686
      %1814 = vmatprep.subr.mxu0 0.0
      %1815 = vmatpush1.msra.mxu0 %v1689
      %1816 = vmatprep.subr.mxu0 0.0
      %1817 = vmatpush1.msra.mxu0 %v1692
      %1818 = vmatprep.subr.mxu0 0.0
      %1819 = vmatpush1.msra.mxu0 %v1695
      %1820 = vmatprep.subr.mxu0 0.0
      %1821 = vmatpush1.msra.mxu0 %v1698
      %1822 = vmatprep.subr.mxu0 0.0
      %1823 = vmatpush1.msra.mxu0 %v1701
      %1824 = vmatprep.subr.mxu0 0.0
      %1825 = vmatpush1.msra.mxu0 %v1704
      %1826 = vmatprep.subr.mxu0 0.0
      %1827 = vmatpush1.msra.mxu0 %v1707
      %1828 = vmatprep.subr.mxu0 0.0
      %1829 = vmatpush1.msra.mxu0 %v1710
      %1830 = vmatprep.subr.mxu0 0.0
      %1831 = vmatpush1.msra.mxu0 0.0
      %1832 = vmatprep.subr.mxu0 0.0
      %1833 = vmatpush1.msra.mxu0 0.0
      %1834 = vmatprep.subr.mxu0 0.0
      %1835 = vmatpush1.msra.mxu0 0.0
      %1836 = vmatprep.subr.mxu0 0.0
      %1837 = vmatpush1.msra.mxu0 0.0
      %1838 = vmatprep.subr.mxu0 0.0
      %1839 = vmatpush1.msra.mxu0 0.0
      %1840 = vmatprep.subr.mxu0 0.0
      %1841 = vmatpush1.msra.mxu0 0.0
      %1842 = vmatprep.subr.mxu0 0.0
      %1843 = vmatpush1.msra.mxu0 0.0
      %1844 = vmatprep.subr.mxu0 0.0
      %1845 = vmatpush1.msra.mxu0 0.0
      %1846 = vmatprep.subr.mxu0 0.0
      %1847 = vmatpush1.msra.mxu0 0.0
      %1848 = vmatprep.subr.mxu0 0.0
      %1849 = vmatpush1.msra.mxu0 0.0
      %1850 = vmatprep.subr.mxu0 0.0
      %1851 = vmatpush1.msra.mxu0 0.0
      %1852 = vmatprep.subr.mxu0 0.0
      %1853 = vmatpush1.msra.mxu0 0.0
      %1854 = vmatprep.subr.mxu0 0.0
      %1855 = vmatpush1.msra.mxu0 0.0
      %1856 = vmatprep.subr.mxu0 0.0
      %1857 = vmatpush1.msra.mxu0 0.0
      %1858 = vmatprep.subr.mxu0 0.0
      %1859 = vmatpush1.msra.mxu0 0.0
      %1860 = vmatprep.subr.mxu0 0.0
      %1861 = vmatpush1.msra.mxu0 0.0
      %1862 = vmatprep.subr.mxu0 0.0
      %1863 = vmatpush1.msra.mxu0 0.0
      %1864 = vmatprep.subr.mxu0 0.0
      %1865 = vmatpush1.msra.mxu0 0.0
      %1866 = vmatprep.subr.mxu0 0.0
      %1867 = vmatpush1.msra.mxu0 0.0
      %1868 = vmatprep.subr.mxu0 0.0
      %1869 = vmatpush1.msra.mxu0 0.0
      %1870 = vmatprep.subr.mxu0 0.0
      %1871 = vmatpush1.msra.mxu0 0.0
      %1872 = vmatprep.subr.mxu0 0.0
      %1873 = vmatpush1.msra.mxu0 0.0
      %1874 = vmatprep.subr.mxu0 0.0
      %1875 = vmatpush1.msra.mxu0 0.0
      %1876 = vmatprep.mubr.f32.mxu0 0.0
      %1877 = vmatmul.mubr.f32.gmra.mrb[0].mxu0 %v1739
      %v1878 = vpop.f32.mrb[0].mxu0
      %v1879 = vadd.f32 %v1610, %v1878
      %v1880 = vpop.f32.mrb[0].mxu0
      %1881 = vdwg.mxu0
      %v1882 = vsel %vm719, %v1808, 0.0
      %v1883 = vsel %vm720, %v1810, 0.0
      %v1884 = vsel %vm721, %v1879, 0.0
      %v1885 = vmax.f32 %v1882, 0.0
      %v1886 = vmax.f32 %v1883, 0.0
      %v1887 = vmax.f32 %v1884, 0.0
      %1888 = vst [vmem:[#allocation3 + $0x8] sm:$0xff] %v1885
      %1889 = vst [vmem:[#allocation3 + $0x10] sm:$0xff] %v1886
      %1890 = vst.msk [vmem:[#allocation3 + $0x18] sm:$0xff] %vm726, %v1887
      %v1891 = vld [vmem:[#allocation3] sm:$0xff]
      %v1892 = vld [vmem:[#allocation3 + $0x8] sm:$0xff]
      %v1893 = vld [vmem:[#allocation3 + $0x10] sm:$0xff]
      %v1894 = vld [vmem:[#allocation3 + $0x18] sm:$0xff]
      %s1895 = scalar_lea.vmem %s3, 24
      %v1896 = vld [vmem:[%s1895] sm:$0xff]
      %s1897 = scalar_lea.vmem %s4, 24
      %v1898 = vld [vmem:[%s1897] sm:$0xff]
      %1903 = vrot.lane.b32.xlu0 %v1891, 127
      %v1904 = vpop.permute.xlu0 %1903
      %1905 = vrot.lane.b32.xlu0 %v1892, 127
      %v1906 = vpop.permute.xlu0 %1905
      %1907 = vrot.lane.b32.xlu0 %v1893, 127
      %v1908 = vpop.permute.xlu0 %1907
      %1909 = vrot.lane.b32.xlu0 %v1894, 127
      %v1910 = vpop.permute.xlu0 %1909
      %v1911 = vsel %vm366, %v1904, %v1906
      %v1912 = vsel %vm366, %v1906, %v1908
      %v1913 = vsel %vm366, %v1908, %v1910
      %1914 = vrot.lane.b32.xlu0 %v1891, 126
      %v1915 = vpop.permute.xlu0 %1914
      %1916 = vrot.lane.b32.xlu0 %v1892, 126
      %v1917 = vpop.permute.xlu0 %1916
      %1918 = vrot.lane.b32.xlu0 %v1893, 126
      %v1919 = vpop.permute.xlu0 %1918
      %1920 = vrot.lane.b32.xlu0 %v1894, 126
      %v1921 = vpop.permute.xlu0 %1920
      %v1922 = vsel %vm378, %v1915, %v1917
      %v1923 = vsel %vm378, %v1917, %v1919
      %v1924 = vsel %vm378, %v1919, %v1921
      %1925 = vrot.lane.b32.xlu0 %v1891, 110
      %v1926 = vpop.permute.xlu0 %1925
      %1927 = vrot.lane.b32.xlu0 %v1892, 110
      %v1928 = vpop.permute.xlu0 %1927
      %1929 = vrot.lane.b32.xlu0 %v1893, 110
      %v1930 = vpop.permute.xlu0 %1929
      %1931 = vrot.lane.b32.xlu0 %v1894, 110
      %v1932 = vpop.permute.xlu0 %1931
      %v1933 = vsel %vm390, %v1926, %v1928
      %v1934 = vsel %vm390, %v1928, %v1930
      %v1935 = vsel %vm390, %v1930, %v1932
      %1936 = vrot.lane.b32.xlu0 %v1892, 109
      %v1937 = vpop.permute.xlu0 %1936
      %1938 = vrot.lane.b32.xlu0 %v1893, 109
      %v1939 = vpop.permute.xlu0 %1938
      %1940 = vrot.lane.b32.xlu0 %v1894, 109
      %v1941 = vpop.permute.xlu0 %1940
      %v1942 = vsel %vm400, %v1937, %v1939
      %v1943 = vsel %vm400, %v1939, %v1941
      %1944 = vrot.lane.b32.xlu0 %v1892, 108
      %v1945 = vpop.permute.xlu0 %1944
      %1946 = vrot.lane.b32.xlu0 %v1893, 108
      %v1947 = vpop.permute.xlu0 %1946
      %1948 = vrot.lane.b32.xlu0 %v1894, 108
      %v1949 = vpop.permute.xlu0 %1948
      %v1950 = vsel %vm409, %v1945, %v1947
      %v1951 = vsel %vm409, %v1947, %v1949
      %1952 = vrot.lane.b32.xlu0 %v1892, 92
      %v1953 = vpop.permute.xlu0 %1952
      %1954 = vrot.lane.b32.xlu0 %v1893, 92
      %v1955 = vpop.permute.xlu0 %1954
      %1956 = vrot.lane.b32.xlu0 %v1894, 92
      %v1957 = vpop.permute.xlu0 %1956
      %v1958 = vsel %vm418, %v1953, %v1955
      %v1959 = vsel %vm418, %v1955, %v1957
      %1960 = vrot.lane.b32.xlu0 %v1892, 91
      %v1961 = vpop.permute.xlu0 %1960
      %1962 = vrot.lane.b32.xlu0 %v1893, 91
      %v1963 = vpop.permute.xlu0 %1962
      %1964 = vrot.lane.b32.xlu0 %v1894, 91
      %v1965 = vpop.permute.xlu0 %1964
      %v1966 = vsel %vm427, %v1961, %v1963
      %v1967 = vsel %vm427, %v1963, %v1965
      %1968 = vrot.lane.b32.xlu0 %v1892, 90
      %v1969 = vpop.permute.xlu0 %1968
      %1970 = vrot.lane.b32.xlu0 %v1893, 90
      %v1971 = vpop.permute.xlu0 %1970
      %1972 = vrot.lane.b32.xlu0 %v1894, 90
      %v1973 = vpop.permute.xlu0 %1972
      %v1974 = vsel %vm436, %v1969, %v1971
      %v1975 = vsel %vm436, %v1971, %v1973
      %1977 = vset.pattern.permute.xlu0 0
      %1978 = vperm.xlu0 %1977, %v1898
      %v1979 = vpop.permute.xlu0 %1978
      %1981 = vrot.lane.b32.xlu0 %v1891, 19
      %v1982 = vpop.permute.xlu0 %1981
      %1983 = vrot.lane.b32.xlu0 %v1892, 19
      %v1984 = vpop.permute.xlu0 %1983
      %1985 = vrot.lane.b32.xlu0 %v1893, 19
      %v1986 = vpop.permute.xlu0 %1985
      %1987 = vrot.lane.b32.xlu0 %v1894, 19
      %v1988 = vpop.permute.xlu0 %1987
      %1989 = vrot.lane.b32.xlu0 %v1911, 19
      %v1990 = vpop.permute.xlu0 %1989
      %1991 = vrot.lane.b32.xlu0 %v1912, 19
      %v1992 = vpop.permute.xlu0 %1991
      %1993 = vrot.lane.b32.xlu0 %v1913, 19
      %v1994 = vpop.permute.xlu0 %1993
      %1995 = vrot.lane.b32.xlu0 %v1910, 19
      %v1996 = vpop.permute.xlu0 %1995
      %1997 = vrot.lane.b32.xlu0 %v1922, 19
      %v1998 = vpop.permute.xlu0 %1997
      %1999 = vrot.lane.b32.xlu0 %v1923, 19
      %v2000 = vpop.permute.xlu0 %1999
      %2001 = vrot.lane.b32.xlu0 %v1924, 19
      %v2002 = vpop.permute.xlu0 %2001
      %2003 = vrot.lane.b32.xlu0 %v1921, 19
      %v2004 = vpop.permute.xlu0 %2003
      %2005 = vrot.lane.b32.xlu0 %v1933, 19
      %v2006 = vpop.permute.xlu0 %2005
      %2007 = vrot.lane.b32.xlu0 %v1934, 19
      %v2008 = vpop.permute.xlu0 %2007
      %2009 = vrot.lane.b32.xlu0 %v1935, 19
      %v2010 = vpop.permute.xlu0 %2009
      %2011 = vrot.lane.b32.xlu0 %v1932, 19
      %v2012 = vpop.permute.xlu0 %2011
      %2013 = vrot.lane.b32.xlu0 %v1937, 19
      %v2014 = vpop.permute.xlu0 %2013
      %2015 = vrot.lane.b32.xlu0 %v1942, 19
      %v2016 = vpop.permute.xlu0 %2015
      %2017 = vrot.lane.b32.xlu0 %v1943, 19
      %v2018 = vpop.permute.xlu0 %2017
      %2019 = vrot.lane.b32.xlu0 %v1941, 19
      %v2020 = vpop.permute.xlu0 %2019
      %2021 = vrot.lane.b32.xlu0 %v1945, 19
      %v2022 = vpop.permute.xlu0 %2021
      %2023 = vrot.lane.b32.xlu0 %v1950, 19
      %v2024 = vpop.permute.xlu0 %2023
      %2025 = vrot.lane.b32.xlu0 %v1951, 19
      %v2026 = vpop.permute.xlu0 %2025
      %2027 = vrot.lane.b32.xlu0 %v1949, 19
      %v2028 = vpop.permute.xlu0 %2027
      %2029 = vrot.lane.b32.xlu0 %v1953, 19
      %v2030 = vpop.permute.xlu0 %2029
      %2031 = vrot.lane.b32.xlu0 %v1958, 19
      %v2032 = vpop.permute.xlu0 %2031
      %2033 = vrot.lane.b32.xlu0 %v1959, 19
      %v2034 = vpop.permute.xlu0 %2033
      %2035 = vrot.lane.b32.xlu0 %v1957, 19
      %v2036 = vpop.permute.xlu0 %2035
      %2037 = vrot.lane.b32.xlu0 %v1961, 19
      %v2038 = vpop.permute.xlu0 %2037
      %2039 = vrot.lane.b32.xlu0 %v1966, 19
      %v2040 = vpop.permute.xlu0 %2039
      %2041 = vrot.lane.b32.xlu0 %v1967, 19
      %v2042 = vpop.permute.xlu0 %2041
      %2043 = vrot.lane.b32.xlu0 %v1965, 19
      %v2044 = vpop.permute.xlu0 %2043
      %2045 = vrot.lane.b32.xlu0 %v1969, 19
      %v2046 = vpop.permute.xlu0 %2045
      %2047 = vrot.lane.b32.xlu0 %v1974, 19
      %v2048 = vpop.permute.xlu0 %2047
      %2049 = vrot.lane.b32.xlu0 %v1975, 19
      %v2050 = vpop.permute.xlu0 %2049
      %2051 = vrot.lane.b32.xlu0 %v1973, 19
      %v2052 = vpop.permute.xlu0 %2051
      %v2053 = vsel %vm516, %v1982, %v1984
      %v2054 = vsel %vm516, %v1984, %v1986
      %v2055 = vsel %vm516, %v1986, %v1988
      %v2056 = vsel %vm516, %v1990, %v1992
      %v2057 = vsel %vm516, %v1992, %v1994
      %v2058 = vsel %vm516, %v1994, %v1996
      %v2059 = vsel %vm516, %v1998, %v2000
      %v2060 = vsel %vm516, %v2000, %v2002
      %v2061 = vsel %vm516, %v2002, %v2004
      %v2062 = vsel %vm516, %v2006, %v2008
      %v2063 = vsel %vm516, %v2008, %v2010
      %v2064 = vsel %vm516, %v2010, %v2012
      %v2065 = vsel %vm516, %v2014, %v2016
      %v2066 = vsel %vm516, %v2016, %v2018
      %v2067 = vsel %vm516, %v2018, %v2020
      %v2068 = vsel %vm516, %v2022, %v2024
      %v2069 = vsel %vm516, %v2024, %v2026
      %v2070 = vsel %vm516, %v2026, %v2028
      %v2071 = vsel %vm516, %v2030, %v2032
      %v2072 = vsel %vm516, %v2032, %v2034
      %v2073 = vsel %vm516, %v2034, %v2036
      %v2074 = vsel %vm516, %v2038, %v2040
      %v2075 = vsel %vm516, %v2040, %v2042
      %v2076 = vsel %vm516, %v2042, %v2044
      %v2077 = vsel %vm516, %v2046, %v2048
      %v2078 = vsel %vm516, %v2048, %v2050
      %v2079 = vsel %vm516, %v2050, %v2052
      %v2108 = vsel %vm571, %v1896, 0
      %2110 = vmatprep.subr.mxu0 %v2054
      %2111 = vmatpush1.msra.mxu0 %v2053
      %2112 = vmatprep.subr.mxu0 %v2057
      %2113 = vmatpush1.msra.mxu0 %v2056
      %2114 = vmatprep.subr.mxu0 %v2060
      %2115 = vmatpush1.msra.mxu0 %v2059
      %2116 = vmatprep.subr.mxu0 %v2063
      %2117 = vmatpush1.msra.mxu0 %v2062
      %2118 = vmatprep.subr.mxu0 %v2066
      %2119 = vmatpush1.msra.mxu0 %v2065
      %2120 = vmatprep.subr.mxu0 %v2069
      %2121 = vmatpush1.msra.mxu0 %v2068
      %2122 = vmatprep.subr.mxu0 %v2072
      %2123 = vmatpush1.msra.mxu0 %v2071
      %2124 = vmatprep.subr.mxu0 %v2075
      %2125 = vmatpush1.msra.mxu0 %v2074
      %2126 = vmatprep.subr.mxu0 %v2078
      %2127 = vmatpush1.msra.mxu0 %v2077
      %2128 = vmatprep.subr.mxu0 0.0
      %2129 = vmatpush1.msra.mxu0 0.0
      %2130 = vmatprep.subr.mxu0 0.0
      %2131 = vmatpush1.msra.mxu0 0.0
      %2132 = vmatprep.subr.mxu0 0.0
      %2133 = vmatpush1.msra.mxu0 0.0
      %2134 = vmatprep.subr.mxu0 0.0
      %2135 = vmatpush1.msra.mxu0 0.0
      %2136 = vmatprep.subr.mxu0 0.0
      %2137 = vmatpush1.msra.mxu0 0.0
      %2138 = vmatprep.subr.mxu0 0.0
      %2139 = vmatpush1.msra.mxu0 0.0
      %2140 = vmatprep.subr.mxu0 0.0
      %2141 = vmatpush1.msra.mxu0 0.0
      %2142 = vmatprep.subr.mxu0 0.0
      %2143 = vmatpush1.msra.mxu0 0.0
      %2144 = vmatprep.subr.mxu0 0.0
      %2145 = vmatpush1.msra.mxu0 0.0
      %2146 = vmatprep.subr.mxu0 0.0
      %2147 = vmatpush1.msra.mxu0 0.0
      %2148 = vmatprep.subr.mxu0 0.0
      %2149 = vmatpush1.msra.mxu0 0.0
      %2150 = vmatprep.subr.mxu0 0.0
      %2151 = vmatpush1.msra.mxu0 0.0
      %2152 = vmatprep.subr.mxu0 0.0
      %2153 = vmatpush1.msra.mxu0 0.0
      %2154 = vmatprep.subr.mxu0 0.0
      %2155 = vmatpush1.msra.mxu0 0.0
      %2156 = vmatprep.subr.mxu0 0.0
      %2157 = vmatpush1.msra.mxu0 0.0
      %2158 = vmatprep.subr.mxu0 0.0
      %2159 = vmatpush1.msra.mxu0 0.0
      %2160 = vmatprep.subr.mxu0 0.0
      %2161 = vmatpush1.msra.mxu0 0.0
      %2162 = vmatprep.subr.mxu0 0.0
      %2163 = vmatpush1.msra.mxu0 0.0
      %2164 = vmatprep.subr.mxu0 0.0
      %2165 = vmatpush1.msra.mxu0 0.0
      %2166 = vmatprep.subr.mxu0 0.0
      %2167 = vmatpush1.msra.mxu0 0.0
      %2168 = vmatprep.subr.mxu0 0.0
      %2169 = vmatpush1.msra.mxu0 0.0
      %2170 = vmatprep.subr.mxu0 0.0
      %2171 = vmatpush1.msra.mxu0 0.0
      %2172 = vmatprep.subr.mxu0 0.0
      %2173 = vmatpush1.msra.mxu0 0.0
      %2174 = vmatprep.mubr.f32.mxu0 0.0
      %2175 = vmatmul.mubr.f32.gmra.mrb[0].mxu0 %v2108
      %v2176 = vpop.f32.mrb[0].mxu0
      %v2177 = vadd.f32 %v1979, %v2176
      %v2178 = vpop.f32.mrb[0].mxu0
      %v2179 = vadd.f32 %v1979, %v2178
      %2180 = vdwg.mxu0
      %2181 = vmatprep.subr.mxu0 0.0
      %2182 = vmatpush1.msra.mxu0 %v2055
      %2183 = vmatprep.subr.mxu0 0.0
      %2184 = vmatpush1.msra.mxu0 %v2058
      %2185 = vmatprep.subr.mxu0 0.0
      %2186 = vmatpush1.msra.mxu0 %v2061
      %2187 = vmatprep.subr.mxu0 0.0
      %2188 = vmatpush1.msra.mxu0 %v2064
      %2189 = vmatprep.subr.mxu0 0.0
      %2190 = vmatpush1.msra.mxu0 %v2067
      %2191 = vmatprep.subr.mxu0 0.0
      %2192 = vmatpush1.msra.mxu0 %v2070
      %2193 = vmatprep.subr.mxu0 0.0
      %2194 = vmatpush1.msra.mxu0 %v2073
      %2195 = vmatprep.subr.mxu0 0.0
      %2196 = vmatpush1.msra.mxu0 %v2076
      %2197 = vmatprep.subr.mxu0 0.0
      %2198 = vmatpush1.msra.mxu0 %v2079
      %2199 = vmatprep.subr.mxu0 0.0
      %2200 = vmatpush1.msra.mxu0 0.0
      %2201 = vmatprep.subr.mxu0 0.0
      %2202 = vmatpush1.msra.mxu0 0.0
      %2203 = vmatprep.subr.mxu0 0.0
      %2204 = vmatpush1.msra.mxu0 0.0
      %2205 = vmatprep.subr.mxu0 0.0
      %2206 = vmatpush1.msra.mxu0 0.0
      %2207 = vmatprep.subr.mxu0 0.0
      %2208 = vmatpush1.msra.mxu0 0.0
      %2209 = vmatprep.subr.mxu0 0.0
      %2210 = vmatpush1.msra.mxu0 0.0
      %2211 = vmatprep.subr.mxu0 0.0
      %2212 = vmatpush1.msra.mxu0 0.0
      %2213 = vmatprep.subr.mxu0 0.0
      %2214 = vmatpush1.msra.mxu0 0.0
      %2215 = vmatprep.subr.mxu0 0.0
      %2216 = vmatpush1.msra.mxu0 0.0
      %2217 = vmatprep.subr.mxu0 0.0
      %2218 = vmatpush1.msra.mxu0 0.0
      %2219 = vmatprep.subr.mxu0 0.0
      %2220 = vmatpush1.msra.mxu0 0.0
      %2221 = vmatprep.subr.mxu0 0.0
      %2222 = vmatpush1.msra.mxu0 0.0
      %2223 = vmatprep.subr.mxu0 0.0
      %2224 = vmatpush1.msra.mxu0 0.0
      %2225 = vmatprep.subr.mxu0 0.0
      %2226 = vmatpush1.msra.mxu0 0.0
      %2227 = vmatprep.subr.mxu0 0.0
      %2228 = vmatpush1.msra.mxu0 0.0
      %2229 = vmatprep.subr.mxu0 0.0
      %2230 = vmatpush1.msra.mxu0 0.0
      %2231 = vmatprep.subr.mxu0 0.0
      %2232 = vmatpush1.msra.mxu0 0.0
      %2233 = vmatprep.subr.mxu0 0.0
      %2234 = vmatpush1.msra.mxu0 0.0
      %2235 = vmatprep.subr.mxu0 0.0
      %2236 = vmatpush1.msra.mxu0 0.0
      %2237 = vmatprep.subr.mxu0 0.0
      %2238 = vmatpush1.msra.mxu0 0.0
      %2239 = vmatprep.subr.mxu0 0.0
      %2240 = vmatpush1.msra.mxu0 0.0
      %2241 = vmatprep.subr.mxu0 0.0
      %2242 = vmatpush1.msra.mxu0 0.0
      %2243 = vmatprep.subr.mxu0 0.0
      %2244 = vmatpush1.msra.mxu0 0.0
      %2245 = vmatprep.mubr.f32.mxu0 0.0
      %2246 = vmatmul.mubr.f32.gmra.mrb[0].mxu0 %v2108
      %v2247 = vpop.f32.mrb[0].mxu0
      %v2248 = vadd.f32 %v1979, %v2247
      %v2249 = vpop.f32.mrb[0].mxu0
      %2250 = vdwg.mxu0
      %v2251 = vsel %vm719, %v2177, 0.0
      %v2252 = vsel %vm720, %v2179, 0.0
      %v2253 = vsel %vm721, %v2248, 0.0
      %v2254 = vadd.f32 %v2251, %v1523
      %v2255 = vadd.f32 %v2252, %v1524
      %v2256 = vadd.f32 %v2253, %v1525
      %v2257 = vmax.f32 %v2254, 0.0
      %v2258 = vmax.f32 %v2255, 0.0
      %v2259 = vmax.f32 %v2256, 0.0
      %2260 = vst [vmem:[#allocation2 + $0x8] sm:$0xff] %v2257
      %2261 = vst [vmem:[#allocation2 + $0x10] sm:$0xff] %v2258
      %2262 = vst.msk [vmem:[#allocation2 + $0x18] sm:$0xff] %vm726, %v2259
      %v2263 = vld [vmem:[#allocation2] sm:$0xff]
      %v2264 = vld [vmem:[#allocation2 + $0x8] sm:$0xff]
      %v2265 = vld [vmem:[#allocation2 + $0x10] sm:$0xff]
      %v2266 = vld [vmem:[#allocation2 + $0x18] sm:$0xff]
      %v2267 = vld [vmem:[%s5] sm:$0xf]
      %v2268 = vld [vmem:[%s6] sm:$0xf]
      %2273 = vrot.lane.b32.xlu0 %v2263, 127
      %v2274 = vpop.permute.xlu0 %2273
      %2275 = vrot.lane.b32.xlu0 %v2264, 127
      %v2276 = vpop.permute.xlu0 %2275
      %2277 = vrot.lane.b32.xlu0 %v2265, 127
      %v2278 = vpop.permute.xlu0 %2277
      %2279 = vrot.lane.b32.xlu0 %v2266, 127
      %v2280 = vpop.permute.xlu0 %2279
      %v2281 = vsel %vm366, %v2274, %v2276
      %v2282 = vsel %vm366, %v2276, %v2278
      %v2283 = vsel %vm366, %v2278, %v2280
      %2284 = vrot.lane.b32.xlu0 %v2263, 126
      %v2285 = vpop.permute.xlu0 %2284
      %2286 = vrot.lane.b32.xlu0 %v2264, 126
      %v2287 = vpop.permute.xlu0 %2286
      %2288 = vrot.lane.b32.xlu0 %v2265, 126
      %v2289 = vpop.permute.xlu0 %2288
      %2290 = vrot.lane.b32.xlu0 %v2266, 126
      %v2291 = vpop.permute.xlu0 %2290
      %v2292 = vsel %vm378, %v2285, %v2287
      %v2293 = vsel %vm378, %v2287, %v2289
      %v2294 = vsel %vm378, %v2289, %v2291
      %2295 = vrot.lane.b32.xlu0 %v2263, 110
      %v2296 = vpop.permute.xlu0 %2295
      %2297 = vrot.lane.b32.xlu0 %v2264, 110
      %v2298 = vpop.permute.xlu0 %2297
      %2299 = vrot.lane.b32.xlu0 %v2265, 110
      %v2300 = vpop.permute.xlu0 %2299
      %2301 = vrot.lane.b32.xlu0 %v2266, 110
      %v2302 = vpop.permute.xlu0 %2301
      %v2303 = vsel %vm390, %v2296, %v2298
      %v2304 = vsel %vm390, %v2298, %v2300
      %v2305 = vsel %vm390, %v2300, %v2302
      %2306 = vrot.lane.b32.xlu0 %v2264, 109
      %v2307 = vpop.permute.xlu0 %2306
      %2308 = vrot.lane.b32.xlu0 %v2265, 109
      %v2309 = vpop.permute.xlu0 %2308
      %2310 = vrot.lane.b32.xlu0 %v2266, 109
      %v2311 = vpop.permute.xlu0 %2310
      %v2312 = vsel %vm400, %v2307, %v2309
      %v2313 = vsel %vm400, %v2309, %v2311
      %2314 = vrot.lane.b32.xlu0 %v2264, 108
      %v2315 = vpop.permute.xlu0 %2314
      %2316 = vrot.lane.b32.xlu0 %v2265, 108
      %v2317 = vpop.permute.xlu0 %2316
      %2318 = vrot.lane.b32.xlu0 %v2266, 108
      %v2319 = vpop.permute.xlu0 %2318
      %v2320 = vsel %vm409, %v2315, %v2317
      %v2321 = vsel %vm409, %v2317, %v2319
      %2322 = vrot.lane.b32.xlu0 %v2264, 92
      %v2323 = vpop.permute.xlu0 %2322
      %2324 = vrot.lane.b32.xlu0 %v2265, 92
      %v2325 = vpop.permute.xlu0 %2324
      %2326 = vrot.lane.b32.xlu0 %v2266, 92
      %v2327 = vpop.permute.xlu0 %2326
      %v2328 = vsel %vm418, %v2323, %v2325
      %v2329 = vsel %vm418, %v2325, %v2327
      %2330 = vrot.lane.b32.xlu0 %v2264, 91
      %v2331 = vpop.permute.xlu0 %2330
      %2332 = vrot.lane.b32.xlu0 %v2265, 91
      %v2333 = vpop.permute.xlu0 %2332
      %2334 = vrot.lane.b32.xlu0 %v2266, 91
      %v2335 = vpop.permute.xlu0 %2334
      %v2336 = vsel %vm427, %v2331, %v2333
      %v2337 = vsel %vm427, %v2333, %v2335
      %2338 = vrot.lane.b32.xlu0 %v2264, 90
      %v2339 = vpop.permute.xlu0 %2338
      %2340 = vrot.lane.b32.xlu0 %v2265, 90
      %v2341 = vpop.permute.xlu0 %2340
      %2342 = vrot.lane.b32.xlu0 %v2266, 90
      %v2343 = vpop.permute.xlu0 %2342
      %v2344 = vsel %vm436, %v2339, %v2341
      %v2345 = vsel %vm436, %v2341, %v2343
      %2347 = vset.pattern.permute.xlu0 0
      %2348 = vperm.xlu0 %2347, %v2268
      %v2349 = vpop.permute.xlu0 %2348
      %2351 = vrot.lane.b32.xlu0 %v2263, 19
      %v2352 = vpop.permute.xlu0 %2351
      %2353 = vrot.lane.b32.xlu0 %v2264, 19
      %v2354 = vpop.permute.xlu0 %2353
      %2355 = vrot.lane.b32.xlu0 %v2265, 19
      %v2356 = vpop.permute.xlu0 %2355
      %2357 = vrot.lane.b32.xlu0 %v2266, 19
      %v2358 = vpop.permute.xlu0 %2357
      %2359 = vrot.lane.b32.xlu0 %v2281, 19
      %v2360 = vpop.permute.xlu0 %2359
      %2361 = vrot.lane.b32.xlu0 %v2282, 19
      %v2362 = vpop.permute.xlu0 %2361
      %2363 = vrot.lane.b32.xlu0 %v2283, 19
      %v2364 = vpop.permute.xlu0 %2363
      %2365 = vrot.lane.b32.xlu0 %v2280, 19
      %v2366 = vpop.permute.xlu0 %2365
      %2367 = vrot.lane.b32.xlu0 %v2292, 19
      %v2368 = vpop.permute.xlu0 %2367
      %2369 = vrot.lane.b32.xlu0 %v2293, 19
      %v2370 = vpop.permute.xlu0 %2369
      %2371 = vrot.lane.b32.xlu0 %v2294, 19
      %v2372 = vpop.permute.xlu0 %2371
      %2373 = vrot.lane.b32.xlu0 %v2291, 19
      %v2374 = vpop.permute.xlu0 %2373
      %2375 = vrot.lane.b32.xlu0 %v2303, 19
      %v2376 = vpop.permute.xlu0 %2375
      %2377 = vrot.lane.b32.xlu0 %v2304, 19
      %v2378 = vpop.permute.xlu0 %2377
      %2379 = vrot.lane.b32.xlu0 %v2305, 19
      %v2380 = vpop.permute.xlu0 %2379
      %2381 = vrot.lane.b32.xlu0 %v2302, 19
      %v2382 = vpop.permute.xlu0 %2381
      %2383 = vrot.lane.b32.xlu0 %v2307, 19
      %v2384 = vpop.permute.xlu0 %2383
      %2385 = vrot.lane.b32.xlu0 %v2312, 19
      %v2386 = vpop.permute.xlu0 %2385
      %2387 = vrot.lane.b32.xlu0 %v2313, 19
      %v2388 = vpop.permute.xlu0 %2387
      %2389 = vrot.lane.b32.xlu0 %v2311, 19
      %v2390 = vpop.permute.xlu0 %2389
      %2391 = vrot.lane.b32.xlu0 %v2315, 19
      %v2392 = vpop.permute.xlu0 %2391
      %2393 = vrot.lane.b32.xlu0 %v2320, 19
      %v2394 = vpop.permute.xlu0 %2393
      %2395 = vrot.lane.b32.xlu0 %v2321, 19
      %v2396 = vpop.permute.xlu0 %2395
      %2397 = vrot.lane.b32.xlu0 %v2319, 19
      %v2398 = vpop.permute.xlu0 %2397
      %2399 = vrot.lane.b32.xlu0 %v2323, 19
      %v2400 = vpop.permute.xlu0 %2399
      %2401 = vrot.lane.b32.xlu0 %v2328, 19
      %v2402 = vpop.permute.xlu0 %2401
      %2403 = vrot.lane.b32.xlu0 %v2329, 19
      %v2404 = vpop.permute.xlu0 %2403
      %2405 = vrot.lane.b32.xlu0 %v2327, 19
      %v2406 = vpop.permute.xlu0 %2405
      %2407 = vrot.lane.b32.xlu0 %v2331, 19
      %v2408 = vpop.permute.xlu0 %2407
      %2409 = vrot.lane.b32.xlu0 %v2336, 19
      %v2410 = vpop.permute.xlu0 %2409
      %2411 = vrot.lane.b32.xlu0 %v2337, 19
      %v2412 = vpop.permute.xlu0 %2411
      %2413 = vrot.lane.b32.xlu0 %v2335, 19
      %v2414 = vpop.permute.xlu0 %2413
      %2415 = vrot.lane.b32.xlu0 %v2339, 19
      %v2416 = vpop.permute.xlu0 %2415
      %2417 = vrot.lane.b32.xlu0 %v2344, 19
      %v2418 = vpop.permute.xlu0 %2417
      %2419 = vrot.lane.b32.xlu0 %v2345, 19
      %v2420 = vpop.permute.xlu0 %2419
      %2421 = vrot.lane.b32.xlu0 %v2343, 19
      %v2422 = vpop.permute.xlu0 %2421
      %v2423 = vsel %vm516, %v2352, %v2354
      %v2424 = vsel %vm516, %v2354, %v2356
      %v2425 = vsel %vm516, %v2356, %v2358
      %v2426 = vsel %vm516, %v2360, %v2362
      %v2427 = vsel %vm516, %v2362, %v2364
      %v2428 = vsel %vm516, %v2364, %v2366
      %v2429 = vsel %vm516, %v2368, %v2370
      %v2430 = vsel %vm516, %v2370, %v2372
      %v2431 = vsel %vm516, %v2372, %v2374
      %v2432 = vsel %vm516, %v2376, %v2378
      %v2433 = vsel %vm516, %v2378, %v2380
      %v2434 = vsel %vm516, %v2380, %v2382
      %v2435 = vsel %vm516, %v2384, %v2386
      %v2436 = vsel %vm516, %v2386, %v2388
      %v2437 = vsel %vm516, %v2388, %v2390
      %v2438 = vsel %vm516, %v2392, %v2394
      %v2439 = vsel %vm516, %v2394, %v2396
      %v2440 = vsel %vm516, %v2396, %v2398
      %v2441 = vsel %vm516, %v2400, %v2402
      %v2442 = vsel %vm516, %v2402, %v2404
      %v2443 = vsel %vm516, %v2404, %v2406
      %v2444 = vsel %vm516, %v2408, %v2410
      %v2445 = vsel %vm516, %v2410, %v2412
      %v2446 = vsel %vm516, %v2412, %v2414
      %v2447 = vsel %vm516, %v2416, %v2418
      %v2448 = vsel %vm516, %v2418, %v2420
      %v2449 = vsel %vm516, %v2420, %v2422
      %v2478 = vsel %vm571, %v2267, 0
      %2480 = vmatprep.subr.mxu0 %v2424
      %2481 = vmatpush1.msra.mxu0 %v2423
      %2482 = vmatprep.subr.mxu0 %v2427
      %2483 = vmatpush1.msra.mxu0 %v2426
      %2484 = vmatprep.subr.mxu0 %v2430
      %2485 = vmatpush1.msra.mxu0 %v2429
      %2486 = vmatprep.subr.mxu0 %v2433
      %2487 = vmatpush1.msra.mxu0 %v2432
      %2488 = vmatprep.subr.mxu0 %v2436
      %2489 = vmatpush1.msra.mxu0 %v2435
      %2490 = vmatprep.subr.mxu0 %v2439
      %2491 = vmatpush1.msra.mxu0 %v2438
      %2492 = vmatprep.subr.mxu0 %v2442
      %2493 = vmatpush1.msra.mxu0 %v2441
      %2494 = vmatprep.subr.mxu0 %v2445
      %2495 = vmatpush1.msra.mxu0 %v2444
      %2496 = vmatprep.subr.mxu0 %v2448
      %2497 = vmatpush1.msra.mxu0 %v2447
      %2498 = vmatprep.subr.mxu0 0.0
      %2499 = vmatpush1.msra.mxu0 0.0
      %2500 = vmatprep.subr.mxu0 0.0
      %2501 = vmatpush1.msra.mxu0 0.0
      %2502 = vmatprep.subr.mxu0 0.0
      %2503 = vmatpush1.msra.mxu0 0.0
      %2504 = vmatprep.subr.mxu0 0.0
      %2505 = vmatpush1.msra.mxu0 0.0
      %2506 = vmatprep.subr.mxu0 0.0
      %2507 = vmatpush1.msra.mxu0 0.0
      %2508 = vmatprep.subr.mxu0 0.0
      %2509 = vmatpush1.msra.mxu0 0.0
      %2510 = vmatprep.subr.mxu0 0.0
      %2511 = vmatpush1.msra.mxu0 0.0
      %2512 = vmatprep.subr.mxu0 0.0
      %2513 = vmatpush1.msra.mxu0 0.0
      %2514 = vmatprep.subr.mxu0 0.0
      %2515 = vmatpush1.msra.mxu0 0.0
      %2516 = vmatprep.subr.mxu0 0.0
      %2517 = vmatpush1.msra.mxu0 0.0
      %2518 = vmatprep.subr.mxu0 0.0
      %2519 = vmatpush1.msra.mxu0 0.0
      %2520 = vmatprep.subr.mxu0 0.0
      %2521 = vmatpush1.msra.mxu0 0.0
      %2522 = vmatprep.subr.mxu0 0.0
      %2523 = vmatpush1.msra.mxu0 0.0
      %2524 = vmatprep.subr.mxu0 0.0
      %2525 = vmatpush1.msra.mxu0 0.0
      %2526 = vmatprep.subr.mxu0 0.0
      %2527 = vmatpush1.msra.mxu0 0.0
      %2528 = vmatprep.subr.mxu0 0.0
      %2529 = vmatpush1.msra.mxu0 0.0
      %2530 = vmatprep.subr.mxu0 0.0
      %2531 = vmatpush1.msra.mxu0 0.0
      %2532 = vmatprep.subr.mxu0 0.0
      %2533 = vmatpush1.msra.mxu0 0.0
      %2534 = vmatprep.subr.mxu0 0.0
      %2535 = vmatpush1.msra.mxu0 0.0
      %2536 = vmatprep.subr.mxu0 0.0
      %2537 = vmatpush1.msra.mxu0 0.0
      %2538 = vmatprep.subr.mxu0 0.0
      %2539 = vmatpush1.msra.mxu0 0.0
      %2540 = vmatprep.subr.mxu0 0.0
      %2541 = vmatpush1.msra.mxu0 0.0
      %2542 = vmatprep.subr.mxu0 0.0
      %2543 = vmatpush1.msra.mxu0 0.0
      %2544 = vmatprep.mubr.f32.mxu0 0.0
      %2545 = vmatmul.mubr.f32.gmra.mrb[0].mxu0 %v2478
      %v2546 = vpop.f32.mrb[0].mxu0
      %v2547 = vadd.f32 %v2349, %v2546
      %v2548 = vpop.f32.mrb[0].mxu0
      %v2549 = vadd.f32 %v2349, %v2548
      %2550 = vdwg.mxu0
      %2551 = vmatprep.subr.mxu0 0.0
      %2552 = vmatpush1.msra.mxu0 %v2425
      %2553 = vmatprep.subr.mxu0 0.0
      %2554 = vmatpush1.msra.mxu0 %v2428
      %2555 = vmatprep.subr.mxu0 0.0
      %2556 = vmatpush1.msra.mxu0 %v2431
      %2557 = vmatprep.subr.mxu0 0.0
      %2558 = vmatpush1.msra.mxu0 %v2434
      %2559 = vmatprep.subr.mxu0 0.0
      %2560 = vmatpush1.msra.mxu0 %v2437
      %2561 = vmatprep.subr.mxu0 0.0
      %2562 = vmatpush1.msra.mxu0 %v2440
      %2563 = vmatprep.subr.mxu0 0.0
      %2564 = vmatpush1.msra.mxu0 %v2443
      %2565 = vmatprep.subr.mxu0 0.0
      %2566 = vmatpush1.msra.mxu0 %v2446
      %2567 = vmatprep.subr.mxu0 0.0
      %2568 = vmatpush1.msra.mxu0 %v2449
      %2569 = vmatprep.subr.mxu0 0.0
      %2570 = vmatpush1.msra.mxu0 0.0
      %2571 = vmatprep.subr.mxu0 0.0
      %2572 = vmatpush1.msra.mxu0 0.0
      %2573 = vmatprep.subr.mxu0 0.0
      %2574 = vmatpush1.msra.mxu0 0.0
      %2575 = vmatprep.subr.mxu0 0.0
      %2576 = vmatpush1.msra.mxu0 0.0
      %2577 = vmatprep.subr.mxu0 0.0
      %2578 = vmatpush1.msra.mxu0 0.0
      %2579 = vmatprep.subr.mxu0 0.0
      %2580 = vmatpush1.msra.mxu0 0.0
      %2581 = vmatprep.subr.mxu0 0.0
      %2582 = vmatpush1.msra.mxu0 0.0
      %2583 = vmatprep.subr.mxu0 0.0
      %2584 = vmatpush1.msra.mxu0 0.0
      %2585 = vmatprep.subr.mxu0 0.0
      %2586 = vmatpush1.msra.mxu0 0.0
      %2587 = vmatprep.subr.mxu0 0.0
      %2588 = vmatpush1.msra.mxu0 0.0
      %2589 = vmatprep.subr.mxu0 0.0
      %2590 = vmatpush1.msra.mxu0 0.0
      %2591 = vmatprep.subr.mxu0 0.0
      %2592 = vmatpush1.msra.mxu0 0.0
      %2593 = vmatprep.subr.mxu0 0.0
      %2594 = vmatpush1.msra.mxu0 0.0
      %2595 = vmatprep.subr.mxu0 0.0
      %2596 = vmatpush1.msra.mxu0 0.0
      %2597 = vmatprep.subr.mxu0 0.0
      %2598 = vmatpush1.msra.mxu0 0.0
      %2599 = vmatprep.subr.mxu0 0.0
      %2600 = vmatpush1.msra.mxu0 0.0
      %2601 = vmatprep.subr.mxu0 0.0
      %2602 = vmatpush1.msra.mxu0 0.0
      %2603 = vmatprep.subr.mxu0 0.0
      %2604 = vmatpush1.msra.mxu0 0.0
      %2605 = vmatprep.subr.mxu0 0.0
      %2606 = vmatpush1.msra.mxu0 0.0
      %2607 = vmatprep.subr.mxu0 0.0
      %2608 = vmatpush1.msra.mxu0 0.0
      %2609 = vmatprep.subr.mxu0 0.0
      %2610 = vmatpush1.msra.mxu0 0.0
      %2611 = vmatprep.subr.mxu0 0.0
      %2612 = vmatpush1.msra.mxu0 0.0
      %2613 = vmatprep.subr.mxu0 0.0
      %2614 = vmatpush1.msra.mxu0 0.0
      %2615 = vmatprep.mubr.f32.mxu0 0.0
      %2616 = vmatmul.mubr.f32.gmra.mrb[0].mxu0 %v2478
      %v2617 = vpop.f32.mrb[0].mxu0
      %v2618 = vadd.f32 %v2349, %v2617
      %v2619 = vpop.f32.mrb[0].mxu0
      %2620 = vdwg.mxu0
      %v2621 = vsel %vm719, %v2547, 0.0
      %v2622 = vsel %vm720, %v2549, 0.0
      %v2623 = vsel %vm721, %v2618, 0.0
      %v2626 = vcombine.low %v2621, %v2622
      %2628 = vst [vmem:[%s278] sm:$0xff] %v2626
      %vm2629 = vcmask 257024
      %2630 = vst.msk [vmem:[%s278 + $0x8] sm:$0xf] %vm2629, %v2623
      %p2631 = scmp.lt.s32.totalorder %s18, 1
      %s2632 = scalar_select %p2631, %s18, 1
      %s2633 = smul.addr %s2632, 3
      %s2634 = smul.addr %s2633, 4
      %s2635 = scalar_lea.vmem %s7, %s2634
      // Predicated region
      $region49: #{rcnn_forward.1} parent=47 // pred_check
        %p2636 = pneg %p188
      $region50: #{rcnn_forward.1} parent=47 // pred_check_branch
        %2638 = sbr.rel (%p2636) target = $region52
      $region51: #{rcnn_forward.1} parent=47 // pred_region
        _
      $region52: #{rcnn_forward.1} parent=47 // pred_fallthru
        _
    $region48: #{rcnn_forward.1} parent=5 // pred_fallthru
      _
    %p2639 = scmp.le.s32.totalorder 2, %s13
    // Predicated region
    $region53: #{rcnn_forward.1} parent=5 // pred_check
      %p2640 = pneg %p2639
    $region54: #{rcnn_forward.1} parent=5 // pred_check_branch
      %2642 = sbr.rel (%p2640) target = $region56
    $region55: #{rcnn_forward.1} parent=5 // pred_region
      %s2643 = ssub.s32 %s13, 2
      // Predicated region
      $region57: #{rcnn_forward.1} parent=55 // pred_check
        %p2644 = pneg %p194
      $region58: #{rcnn_forward.1} parent=55 // pred_check_branch
        %2646 = sbr.rel (%p2644) target = $region60
      $region59: #{rcnn_forward.1} parent=55 // pred_region
        %p2647 = scmp.lt.s32.totalorder %s19, 1
        %s2648 = scalar_select %p2647, %s19, 1
        %s2649 = smul.addr %s2648, 3
        %s2650 = smul.addr %s2649, 4
        %s2651 = scalar_lea.vmem %s7, %s2650
      $region60: #{rcnn_forward.1} parent=55 // pred_fallthru
        _
    $region56: #{rcnn_forward.1} parent=5 // pred_fallthru
      _
  $region6: #{rcnn_forward.1} parent=0 // loop_footer
    %s17 = sadd.s32 1, %s13
  $region7: #{rcnn_forward.1} parent=0 // loop_footer_branch
    %12 = sbr.rel target = $region3
  $region8: #{rcnn_forward.1} parent=0 // loop_exit
    _

</llo_original>
